<compile_context>
chip_gen: v7x
topology: tpu7x:2x2x1
jax: 0.10.0
libtpu: 0.0.40
codegen_flags: <defaults>
</compile_context>

<pallas_src>
import math

import jax
import jax.numpy as jnp
from jax.experimental import pallas as pl
from jax.experimental.pallas import tpu as pltpu


def _elu(x):
    # ELU(alpha=1): x if x > 0 else exp(x) - 1.
    # (jnp.expm1 is not guaranteed a Mosaic lowering; exp keeps the EUP slot and
    #  the extra subtract is negligible VALU filler.)
    return jnp.where(x > 0, x, jnp.exp(x) - 1.0)


def _round_up(n, m):
    return ((n + m - 1) // m) * m


# ---------------------------------------------------------------------------
# Kernel
# ---------------------------------------------------------------------------
def rank_model_pro2_kernel(
    x_ref,      # [TB, in_size]   (bf16 or f32)
    w1o_ref,    # [in_size, 384]  cols 0:256 = w1, col 256 = w_obs, 257:384 = 0
    b1_ref,     # [1, 256] f32
    w2_ref,     # [256, 128]
    b2_ref,     # [1, 128] f32
    w3_ref,     # [128, 64]
    b3_ref,     # [1, 64]  f32
    w4_ref,     # [1, 64]  final head as a row vector (VPU/XLU, not MXU)
    out_ref,    # [TB, 2]  col 0 = output_sel, col 1 = output
):
    cdt = w1o_ref.dtype
    x = x_ref[...].astype(cdt)

    # One MXU pass over x covers both the first MLP layer and the observe head
    # (w_obs fused as column 256 of the padded first-layer weight).
    h0 = jnp.dot(x, w1o_ref[...], preferred_element_type=jnp.float32)   # [TB, 384]
    out_sel = h0[:, 256:257]                                            # [TB, 1]

    h = _elu(h0[:, :256] + b1_ref[...])                                 # [TB, 256] f32
    h = _elu(jnp.dot(h.astype(cdt), w2_ref[...],
                     preferred_element_type=jnp.float32) + b2_ref[...])  # [TB, 128]
    h = _elu(jnp.dot(h.astype(cdt), w3_ref[...],
                     preferred_element_type=jnp.float32) + b3_ref[...])  # [TB, 64]

    # Linear(64, 1, bias=False): VPU multiply + lane reduction (an N=1 MXU
    # matmul would waste 127/128+ of the tile).
    out_head = jnp.sum(h * w4_ref[...].astype(jnp.float32),
                       axis=-1, keepdims=True)                          # [TB, 1]

    # Single store of both heads (avoids two masked 1-lane partial stores).
    out_ref[...] = jnp.concatenate([out_sel, out_head], axis=-1)


# ---------------------------------------------------------------------------
# Tiling / VMEM heuristics
# ---------------------------------------------------------------------------
def _vmem_budget_bytes():
    try:
        cap = int(pltpu.get_tpu_info().vmem_capacity_bytes)  # 128 MiB v5e/v6e, 64 MiB v7x
    except Exception:
        cap = 64 << 20  # conservative (v7x-sized) fallback
    # ~75% of physical: headroom for compiler-internal scratch + pipeline buffers.
    return max(32 << 20, (cap * 3) // 4)


def _choose_tb(B, in_size, x_itemsize, w_itemsize, vmem_budget):
    # Sublane granularity of the batch tile (bf16 packs 16 rows per vreg).
    gran = 8 if x_itemsize >= 4 else (16 if x_itemsize == 2 else 32)
    rows = _round_up(B, gran)

    # Target >= ~2 MiB of x per grid step so the ~0.35us/step overhead and DMA
    # setup are amortized (small tiles reach only ~30% of HBM roofline).
    tb = max(512, _round_up(pl.cdiv(2 << 20, max(1, in_size * x_itemsize)), gran))

    # VMEM cap: resident weights (worst case 2 pipeline buffers) + streamed rows.
    weight_bytes = (w_itemsize * (in_size * 384 + 256 * 128 + 128 * 64 + 64)
                    + 4 * (256 + 128 + 64))
    per_row = (2 * in_size * x_itemsize            # double-buffered x tile
               + 2 * 2 * 4                         # double-buffered [., 2] f32 out tile
               + 4 * (384 + 256 + 128 + 64 + 8))   # f32 intermediates
    avail = vmem_budget - 2 * weight_bytes - (8 << 20)  # slack for compiler scratch
    if avail < per_row * gran:
        # TODO(synk): K-tile the first-layer matmul over in_size for huge in_size.
        raise ValueError(
            f"in_size={in_size} too large for a VMEM-resident first-layer weight")
    tb_max = (avail // per_row) // gran * gran
    tb = min(tb, tb_max, rows)

    # Keep >= 2 grid steps when there is enough work so the "parallel" batch
    # axis can shard across both TensorCores on v7x.
    if rows >= 2 * 512:
        tb = min(tb, _round_up(pl.cdiv(rows, 2), gran))
    return max(tb, gran)


# ---------------------------------------------------------------------------
# Parameter preparation (one-time, NOT per forward call)
# ---------------------------------------------------------------------------
def prepare_params(raw, compute_dtype=jnp.bfloat16):
    """Fuse the observe head into the first-layer weight and store weights in
    the (bf16) compute dtype. Biases stay f32 (added to f32 accumulators)."""
    in_size = raw["w1"].shape[0]
    w1o = jnp.zeros((in_size, 384), compute_dtype)
    w1o = w1o.at[:, :256].set(raw["w1"].astype(compute_dtype))
    w1o = w1o.at[:, 256:257].set(raw["w_obs"].astype(compute_dtype))
    return {
        "w1o": w1o,
        "b1": raw["b1"].astype(jnp.float32).reshape(1, 256),
        "w2": raw["w2"].astype(compute_dtype),
        "b2": raw["b2"].astype(jnp.float32).reshape(1, 128),
        "w3": raw["w3"].astype(compute_dtype),
        "b3": raw["b3"].astype(jnp.float32).reshape(1, 64),
        "w4_row": raw["w4"].reshape(1, 64).astype(compute_dtype),
    }


# ---------------------------------------------------------------------------
# Forward wrapper
# ---------------------------------------------------------------------------
def rank_model_pro2_forward(x, p, *, tb=None):
    """x: [B, in_size] (bf16 recommended). p: prepare_params() output.
    Returns (output_sel [B, 1] f32, output [B, 1] f32)."""
    B, in_size = x.shape
    assert p["w1o"].shape[0] == in_size

    budget = _vmem_budget_bytes()
    TB = tb if tb is not None else _choose_tb(
        B, in_size, x.dtype.itemsize, p["w1o"].dtype.itemsize, budget)
    grid = (pl.cdiv(B, TB),)   # partial last block is masked by Pallas; no host pad

    resident = lambda i: (0, 0)  # constant index map -> stays in VMEM across steps

    def build(single_buffer_weights):
        if single_buffer_weights:
            wspec = lambda a: pl.BlockSpec(a.shape, resident,
                                           pipeline_mode=pl.Buffered(1))
        else:
            wspec = lambda a: pl.BlockSpec(a.shape, resident)
        return pl.pallas_call(
            rank_model_pro2_kernel,
            out_shape=jax.ShapeDtypeStruct((B, 2), jnp.float32),
            grid=grid,
            in_specs=[pl.BlockSpec((TB, in_size), lambda i: (i, 0)),
                      wspec(p["w1o"]), wspec(p["b1"]), wspec(p["w2"]),
                      wspec(p["b2"]), wspec(p["w3"]), wspec(p["b3"]),
                      wspec(p["w4_row"])],
            out_specs=pl.BlockSpec((TB, 2), lambda i: (i, 0)),
            compiler_params=pltpu.CompilerParams(
                dimension_semantics=("parallel",),
                vmem_limit_bytes=int(budget),
            ),
        )

    args = (x, p["w1o"], p["b1"], p["w2"], p["b2"], p["w3"], p["b3"], p["w4_row"])
    try:
        # Invariant weights only need one pipeline buffer (saves VMEM on v7x).
        out = build(single_buffer_weights=True)(*args)
    except Exception:
        # pipeline_mode=pl.Buffered(1) unsupported on this jax version -> default 2-deep.
        out = build(single_buffer_weights=False)(*args)

    return out[:, 0:1], out[:, 1:2]


# ---------------------------------------------------------------------------
# Init + references
# ---------------------------------------------------------------------------
def xavier_normal(key, fan_in, fan_out):
    std = math.sqrt(2.0 / (fan_in + fan_out))
    # stored as [in_features, out_features] so the kernel does x @ W
    return std * jax.random.normal(key, (fan_in, fan_out), dtype=jnp.float32)


def init_params(key, in_size):
    ks = jax.random.split(key, 5)
    return {
        "w1": xavier_normal(ks[0], in_size, 256),
        "b1": jnp.zeros((1, 256), jnp.float32),
        "w2": xavier_normal(ks[1], 256, 128),
        "b2": jnp.zeros((1, 128), jnp.float32),
        "w3": xavier_normal(ks[2], 128, 64),
        "b3": jnp.zeros((1, 64), jnp.float32),
        "w4": xavier_normal(ks[3], 64, 1),          # bias=False
        "w_obs": xavier_normal(ks[4], in_size, 1),  # bias=False
    }


def reference_forward_prepared(x, p):
    """Mirrors the kernel's dtype pipeline (bf16 storage, f32 accumulation)."""
    cdt = p["w1o"].dtype
    xb = x.astype(cdt)
    h0 = jnp.dot(xb, p["w1o"], preferred_element_type=jnp.float32)
    out_sel = h0[:, 256:257]
    h = _elu(h0[:, :256] + p["b1"])
    h = _elu(jnp.dot(h.astype(cdt), p["w2"], preferred_element_type=jnp.float32) + p["b2"])
    h = _elu(jnp.dot(h.astype(cdt), p["w3"], preferred_element_type=jnp.float32) + p["b3"])
    out = jnp.sum(h * p["w4_row"].astype(jnp.float32), axis=-1, keepdims=True)
    return out_sel, out


def reference_forward_f32(x, raw):
    """Original-module (all-f32) semantics, eval mode (Dropout = identity)."""
    hp = jax.lax.Precision.HIGHEST
    h = _elu(jnp.dot(x, raw["w1"], precision=hp) + raw["b1"])
    h = _elu(jnp.dot(h, raw["w2"], precision=hp) + raw["b2"])
    h = _elu(jnp.dot(h, raw["w3"], precision=hp) + raw["b3"])
    out = jnp.dot(h, raw["w4"], precision=hp)
    out_sel = jnp.dot(x, raw["w_obs"], precision=hp)
    return out_sel, out


if __name__ == "__main__":
    key = jax.random.PRNGKey(0)
    k_x, k_p = jax.random.split(key)

    # Small shapes; B deliberately not a tile multiple to exercise the
    # un-padded partial-block (masked write) path.
    B, in_size = 20, 32
    x_f32 = jax.random.normal(k_x, (B, in_size), dtype=jnp.float32)
    x = x_f32.astype(jnp.bfloat16)       # stream the dominant x input in bf16

    raw = init_params(k_p, in_size)      # f32 "PyTorch module" parameters
    params = prepare_params(raw)         # fused + bf16-resident kernel parameters

    out_sel, out = rank_model_pro2_forward(x, params)
    jax.block_until_ready((out_sel, out))
    assert out_sel.shape == (B, 1) and out.shape == (B, 1)

    # Matched reference (same bf16 storage / f32 accumulation) -> tight check.
    ref_sel, ref_out = reference_forward_prepared(x, params)
    assert jnp.allclose(out_sel, ref_sel, atol=2e-3, rtol=2e-3)
    assert jnp.allclose(out, ref_out, atol=2e-3, rtol=2e-3)

    # Full-f32 module semantics -> loose check (bf16 storage quantization).
    f32_sel, f32_out = reference_forward_f32(x_f32, raw)
    assert jnp.allclose(out_sel, f32_sel, atol=5e-2, rtol=5e-2)
    assert jnp.allclose(out, f32_out, atol=5e-2, rtol=5e-2)

    print("KERNEL_OK")
</pallas_src>

<mosaic_0001>
module attributes {stable_mosaic.version = 11 : i64} {
  func.func @rank_model_pro2_kernel(%arg0: i32, %arg1: memref<32x32xbf16, #tpu.memory_space<vmem>>, %arg2: memref<32x384xbf16, #tpu.memory_space<vmem>>, %arg3: memref<1x256xf32, #tpu.memory_space<vmem>>, %arg4: memref<256x128xbf16, #tpu.memory_space<vmem>>, %arg5: memref<1x128xf32, #tpu.memory_space<vmem>>, %arg6: memref<128x64xbf16, #tpu.memory_space<vmem>>, %arg7: memref<1x64xf32, #tpu.memory_space<vmem>>, %arg8: memref<1x64xbf16, #tpu.memory_space<vmem>>, %arg9: memref<32x2xf32, #tpu.memory_space<vmem>>) attributes {dimension_semantics = [#tpu.dimension_semantics<parallel>], iteration_bounds = array<i64: 1>, scalar_prefetch = 0 : i64, scratch_operands = 0 : i64, tpu.core_type = #tpu.core_type<tc>, window_params = [{transform_indices = @transform_0, window_bounds = array<i64: 32, 32>}, {pipeline_mode = #tpu.pipeline_mode<synchronous>, transform_indices = @transform_1, window_bounds = array<i64: 32, 384>}, {pipeline_mode = #tpu.pipeline_mode<synchronous>, transform_indices = @transform_2, window_bounds = array<i64: 1, 256>}, {pipeline_mode = #tpu.pipeline_mode<synchronous>, transform_indices = @transform_3, window_bounds = array<i64: 256, 128>}, {pipeline_mode = #tpu.pipeline_mode<synchronous>, transform_indices = @transform_4, window_bounds = array<i64: 1, 128>}, {pipeline_mode = #tpu.pipeline_mode<synchronous>, transform_indices = @transform_5, window_bounds = array<i64: 128, 64>}, {pipeline_mode = #tpu.pipeline_mode<synchronous>, transform_indices = @transform_6, window_bounds = array<i64: 1, 64>}, {pipeline_mode = #tpu.pipeline_mode<synchronous>, transform_indices = @transform_7, window_bounds = array<i64: 1, 64>}, {transform_indices = @transform_8, window_bounds = array<i64: 32, 2>}]} {
    %c0 = arith.constant 0 : index
    %c0_0 = arith.constant 0 : index
    %0 = vector.load %arg1[%c0, %c0_0] : memref<32x32xbf16, #tpu.memory_space<vmem>>, vector<32x32xbf16>
    %c0_1 = arith.constant 0 : index
    %c0_2 = arith.constant 0 : index
    %1 = vector.load %arg2[%c0_1, %c0_2] : memref<32x384xbf16, #tpu.memory_space<vmem>>, vector<32x384xbf16>
    %cst = arith.constant dense<0.000000e+00> : vector<32x384xf32>
    %2 = tpu.matmul %0, %1, %cst {dimension_numbers = #tpu.dot_dimension_numbers<[1], [0], [0], [1], [0, 0, 1, 1], [], []>} : vector<32x32xbf16>, vector<32x384xbf16>, vector<32x384xf32> -> vector<32x384xf32>
    %3 = vector.extract_strided_slice %2 {offsets = [0, 256], sizes = [32, 1], strides = [1, 1]} : vector<32x384xf32> to vector<32x1xf32>
    %4 = vector.extract_strided_slice %2 {offsets = [0, 0], sizes = [32, 256], strides = [1, 1]} : vector<32x384xf32> to vector<32x256xf32>
    %c0_3 = arith.constant 0 : index
    %c0_4 = arith.constant 0 : index
    %5 = vector.load %arg3[%c0_3, %c0_4] : memref<1x256xf32, #tpu.memory_space<vmem>>, vector<1x256xf32>
    %6 = vector.broadcast %5 : vector<1x256xf32> to vector<32x256xf32>
    %7 = arith.addf %4, %6 : vector<32x256xf32>
    %cst_5 = arith.constant 0.000000e+00 : f32
    %8 = vector.broadcast %cst_5 : f32 to vector<32x256xf32>
    %9 = arith.cmpf ogt, %7, %8 : vector<32x256xf32>
    %10 = math.exp %7 : vector<32x256xf32>
    %cst_6 = arith.constant 1.000000e+00 : f32
    %11 = vector.broadcast %cst_6 : f32 to vector<32x256xf32>
    %12 = arith.subf %10, %11 : vector<32x256xf32>
    %13 = arith.select %9, %7, %12 : vector<32x256xi1>, vector<32x256xf32>
    %14 = arith.truncf %13 : vector<32x256xf32> to vector<32x256xbf16>
    %c0_7 = arith.constant 0 : index
    %c0_8 = arith.constant 0 : index
    %15 = vector.load %arg4[%c0_7, %c0_8] : memref<256x128xbf16, #tpu.memory_space<vmem>>, vector<256x128xbf16>
    %cst_9 = arith.constant dense<0.000000e+00> : vector<32x128xf32>
    %16 = tpu.matmul %14, %15, %cst_9 {dimension_numbers = #tpu.dot_dimension_numbers<[1], [0], [0], [1], [0, 0, 1, 1], [], []>} : vector<32x256xbf16>, vector<256x128xbf16>, vector<32x128xf32> -> vector<32x128xf32>
    %c0_10 = arith.constant 0 : index
    %c0_11 = arith.constant 0 : index
    %17 = vector.load %arg5[%c0_10, %c0_11] : memref<1x128xf32, #tpu.memory_space<vmem>>, vector<1x128xf32>
    %18 = vector.broadcast %17 : vector<1x128xf32> to vector<32x128xf32>
    %19 = arith.addf %16, %18 : vector<32x128xf32>
    %cst_12 = arith.constant 0.000000e+00 : f32
    %20 = vector.broadcast %cst_12 : f32 to vector<32x128xf32>
    %21 = arith.cmpf ogt, %19, %20 : vector<32x128xf32>
    %22 = math.exp %19 : vector<32x128xf32>
    %cst_13 = arith.constant 1.000000e+00 : f32
    %23 = vector.broadcast %cst_13 : f32 to vector<32x128xf32>
    %24 = arith.subf %22, %23 : vector<32x128xf32>
    %25 = arith.select %21, %19, %24 : vector<32x128xi1>, vector<32x128xf32>
    %26 = arith.truncf %25 : vector<32x128xf32> to vector<32x128xbf16>
    %c0_14 = arith.constant 0 : index
    %c0_15 = arith.constant 0 : index
    %27 = vector.load %arg6[%c0_14, %c0_15] : memref<128x64xbf16, #tpu.memory_space<vmem>>, vector<128x64xbf16>
    %cst_16 = arith.constant dense<0.000000e+00> : vector<32x64xf32>
    %28 = tpu.matmul %26, %27, %cst_16 {dimension_numbers = #tpu.dot_dimension_numbers<[1], [0], [0], [1], [0, 0, 1, 1], [], []>} : vector<32x128xbf16>, vector<128x64xbf16>, vector<32x64xf32> -> vector<32x64xf32>
    %c0_17 = arith.constant 0 : index
    %c0_18 = arith.constant 0 : index
    %29 = vector.load %arg7[%c0_17, %c0_18] : memref<1x64xf32, #tpu.memory_space<vmem>>, vector<1x64xf32>
    %30 = vector.broadcast %29 : vector<1x64xf32> to vector<32x64xf32>
    %31 = arith.addf %28, %30 : vector<32x64xf32>
    %cst_19 = arith.constant 0.000000e+00 : f32
    %32 = vector.broadcast %cst_19 : f32 to vector<32x64xf32>
    %33 = arith.cmpf ogt, %31, %32 : vector<32x64xf32>
    %34 = math.exp %31 : vector<32x64xf32>
    %cst_20 = arith.constant 1.000000e+00 : f32
    %35 = vector.broadcast %cst_20 : f32 to vector<32x64xf32>
    %36 = arith.subf %34, %35 : vector<32x64xf32>
    %37 = arith.select %33, %31, %36 : vector<32x64xi1>, vector<32x64xf32>
    %c0_21 = arith.constant 0 : index
    %c0_22 = arith.constant 0 : index
    %38 = vector.load %arg8[%c0_21, %c0_22] : memref<1x64xbf16, #tpu.memory_space<vmem>>, vector<1x64xbf16>
    %39 = arith.extf %38 : vector<1x64xbf16> to vector<1x64xf32>
    %40 = vector.broadcast %39 : vector<1x64xf32> to vector<32x64xf32>
    %41 = arith.mulf %37, %40 : vector<32x64xf32>
    %cst_23 = arith.constant dense<0.000000e+00> : vector<32xf32>
    %42 = vector.multi_reduction <add>, %41, %cst_23 [1] : vector<32x64xf32> to vector<32xf32>
    %43 = vector.shape_cast %42 : vector<32xf32> to vector<32x1xf32>
    %44 = tpu.concatenate %3, %43 in 1 : vector<32x1xf32>, vector<32x1xf32> -> vector<32x2xf32>
    %c0_24 = arith.constant 0 : index
    %c0_25 = arith.constant 0 : index
    %45 = vector.load %arg9[%c0_24, %c0_25] : memref<32x2xf32, #tpu.memory_space<vmem>>, vector<32x2xf32>
    tpu.vector_store %arg9[%c0_24, %c0_25], %44 {strides = array<i32>} : memref<32x2xf32, #tpu.memory_space<vmem>>, vector<32x2xf32>,
    return
  }
  func.func @transform_0(%arg0: i32) -> (i32, i32) {
    %c0_i32 = arith.constant 0 : i32
    %c0_i32_0 = arith.constant 0 : i32
    return %arg0, %c0_i32 : i32, i32
  }
  func.func @transform_1(%arg0: i32) -> (i32, i32) {
    %c0_i32 = arith.constant 0 : i32
    %c0_i32_0 = arith.constant 0 : i32
    %c0_i32_1 = arith.constant 0 : i32
    return %c0_i32, %c0_i32_0 : i32, i32
  }
  func.func @transform_2(%arg0: i32) -> (i32, i32) {
    %c0_i32 = arith.constant 0 : i32
    %c0_i32_0 = arith.constant 0 : i32
    %c0_i32_1 = arith.constant 0 : i32
    return %c0_i32, %c0_i32_0 : i32, i32
  }
  func.func @transform_3(%arg0: i32) -> (i32, i32) {
    %c0_i32 = arith.constant 0 : i32
    %c0_i32_0 = arith.constant 0 : i32
    %c0_i32_1 = arith.constant 0 : i32
    return %c0_i32, %c0_i32_0 : i32, i32
  }
  func.func @transform_4(%arg0: i32) -> (i32, i32) {
    %c0_i32 = arith.constant 0 : i32
    %c0_i32_0 = arith.constant 0 : i32
    %c0_i32_1 = arith.constant 0 : i32
    return %c0_i32, %c0_i32_0 : i32, i32
  }
  func.func @transform_5(%arg0: i32) -> (i32, i32) {
    %c0_i32 = arith.constant 0 : i32
    %c0_i32_0 = arith.constant 0 : i32
    %c0_i32_1 = arith.constant 0 : i32
    return %c0_i32, %c0_i32_0 : i32, i32
  }
  func.func @transform_6(%arg0: i32) -> (i32, i32) {
    %c0_i32 = arith.constant 0 : i32
    %c0_i32_0 = arith.constant 0 : i32
    %c0_i32_1 = arith.constant 0 : i32
    return %c0_i32, %c0_i32_0 : i32, i32
  }
  func.func @transform_7(%arg0: i32) -> (i32, i32) {
    %c0_i32 = arith.constant 0 : i32
    %c0_i32_0 = arith.constant 0 : i32
    %c0_i32_1 = arith.constant 0 : i32
    return %c0_i32, %c0_i32_0 : i32, i32
  }
  func.func @transform_8(%arg0: i32) -> (i32, i32) {
    %c0_i32 = arith.constant 0 : i32
    %c0_i32_0 = arith.constant 0 : i32
    return %arg0, %c0_i32 : i32, i32
  }
}

module attributes {stable_mosaic.version = 11 : i64} {
  func.func @rank_model_pro2_kernel(%arg0: i32, %arg1: memref<32x32xbf16, #tpu.memory_space<vmem>>, %arg2: memref<32x384xbf16, #tpu.memory_space<vmem>>, %arg3: memref<1x256xf32, #tpu.memory_space<vmem>>, %arg4: memref<256x128xbf16, #tpu.memory_space<vmem>>, %arg5: memref<1x128xf32, #tpu.memory_space<vmem>>, %arg6: memref<128x64xbf16, #tpu.memory_space<vmem>>, %arg7: memref<1x64xf32, #tpu.memory_space<vmem>>, %arg8: memref<1x64xbf16, #tpu.memory_space<vmem>>, %arg9: memref<32x2xf32, #tpu.memory_space<vmem>>) attributes {dimension_semantics = [#tpu.dimension_semantics<parallel>], iteration_bounds = array<i64: 1>, scalar_prefetch = 0 : i64, scratch_operands = 0 : i64, tpu.core_type = #tpu.core_type<tc>, window_params = [{transform_indices = @transform_0, window_bounds = array<i64: 32, 32>}, {pipeline_mode = #tpu.pipeline_mode<synchronous>, transform_indices = @transform_1, window_bounds = array<i64: 32, 384>}, {pipeline_mode = #tpu.pipeline_mode<synchronous>, transform_indices = @transform_2, window_bounds = array<i64: 1, 256>}, {pipeline_mode = #tpu.pipeline_mode<synchronous>, transform_indices = @transform_3, window_bounds = array<i64: 256, 128>}, {pipeline_mode = #tpu.pipeline_mode<synchronous>, transform_indices = @transform_4, window_bounds = array<i64: 1, 128>}, {pipeline_mode = #tpu.pipeline_mode<synchronous>, transform_indices = @transform_5, window_bounds = array<i64: 128, 64>}, {pipeline_mode = #tpu.pipeline_mode<synchronous>, transform_indices = @transform_6, window_bounds = array<i64: 1, 64>}, {pipeline_mode = #tpu.pipeline_mode<synchronous>, transform_indices = @transform_7, window_bounds = array<i64: 1, 64>}, {transform_indices = @transform_8, window_bounds = array<i64: 32, 2>}]} {
    %c0 = arith.constant 0 : index
    %c0_0 = arith.constant 0 : index
    %0 = vector.load %arg1[%c0, %c0_0] : memref<32x32xbf16, #tpu.memory_space<vmem>>, vector<32x32xbf16>
    %c0_1 = arith.constant 0 : index
    %c0_2 = arith.constant 0 : index
    %1 = vector.load %arg2[%c0_1, %c0_2] : memref<32x384xbf16, #tpu.memory_space<vmem>>, vector<32x384xbf16>
    %cst = arith.constant dense<0.000000e+00> : vector<32x384xf32>
    %2 = tpu.matmul %0, %1, %cst {dimension_numbers = #tpu.dot_dimension_numbers<[1], [0], [0], [1], [0, 0, 1, 1], [], []>} : vector<32x32xbf16>, vector<32x384xbf16>, vector<32x384xf32> -> vector<32x384xf32>
    %3 = vector.extract_strided_slice %2 {offsets = [0, 256], sizes = [32, 1], strides = [1, 1]} : vector<32x384xf32> to vector<32x1xf32>
    %4 = vector.extract_strided_slice %2 {offsets = [0, 0], sizes = [32, 256], strides = [1, 1]} : vector<32x384xf32> to vector<32x256xf32>
    %c0_3 = arith.constant 0 : index
    %c0_4 = arith.constant 0 : index
    %5 = vector.load %arg3[%c0_3, %c0_4] : memref<1x256xf32, #tpu.memory_space<vmem>>, vector<1x256xf32>
    %6 = vector.broadcast %5 : vector<1x256xf32> to vector<32x256xf32>
    %7 = arith.addf %4, %6 : vector<32x256xf32>
    %cst_5 = arith.constant 0.000000e+00 : f32
    %8 = vector.broadcast %cst_5 : f32 to vector<32x256xf32>
    %9 = arith.cmpf ogt, %7, %8 : vector<32x256xf32>
    %10 = math.exp %7 : vector<32x256xf32>
    %cst_6 = arith.constant 1.000000e+00 : f32
    %11 = vector.broadcast %cst_6 : f32 to vector<32x256xf32>
    %12 = arith.subf %10, %11 : vector<32x256xf32>
    %13 = arith.select %9, %7, %12 : vector<32x256xi1>, vector<32x256xf32>
    %14 = arith.truncf %13 : vector<32x256xf32> to vector<32x256xbf16>
    %c0_7 = arith.constant 0 : index
    %c0_8 = arith.constant 0 : index
    %15 = vector.load %arg4[%c0_7, %c0_8] : memref<256x128xbf16, #tpu.memory_space<vmem>>, vector<256x128xbf16>
    %cst_9 = arith.constant dense<0.000000e+00> : vector<32x128xf32>
    %16 = tpu.matmul %14, %15, %cst_9 {dimension_numbers = #tpu.dot_dimension_numbers<[1], [0], [0], [1], [0, 0, 1, 1], [], []>} : vector<32x256xbf16>, vector<256x128xbf16>, vector<32x128xf32> -> vector<32x128xf32>
    %c0_10 = arith.constant 0 : index
    %c0_11 = arith.constant 0 : index
    %17 = vector.load %arg5[%c0_10, %c0_11] : memref<1x128xf32, #tpu.memory_space<vmem>>, vector<1x128xf32>
    %18 = vector.broadcast %17 : vector<1x128xf32> to vector<32x128xf32>
    %19 = arith.addf %16, %18 : vector<32x128xf32>
    %cst_12 = arith.constant 0.000000e+00 : f32
    %20 = vector.broadcast %cst_12 : f32 to vector<32x128xf32>
    %21 = arith.cmpf ogt, %19, %20 : vector<32x128xf32>
    %22 = math.exp %19 : vector<32x128xf32>
    %cst_13 = arith.constant 1.000000e+00 : f32
    %23 = vector.broadcast %cst_13 : f32 to vector<32x128xf32>
    %24 = arith.subf %22, %23 : vector<32x128xf32>
    %25 = arith.select %21, %19, %24 : vector<32x128xi1>, vector<32x128xf32>
    %26 = arith.truncf %25 : vector<32x128xf32> to vector<32x128xbf16>
    %c0_14 = arith.constant 0 : index
    %c0_15 = arith.constant 0 : index
    %27 = vector.load %arg6[%c0_14, %c0_15] : memref<128x64xbf16, #tpu.memory_space<vmem>>, vector<128x64xbf16>
    %cst_16 = arith.constant dense<0.000000e+00> : vector<32x64xf32>
    %28 = tpu.matmul %26, %27, %cst_16 {dimension_numbers = #tpu.dot_dimension_numbers<[1], [0], [0], [1], [0, 0, 1, 1], [], []>} : vector<32x128xbf16>, vector<128x64xbf16>, vector<32x64xf32> -> vector<32x64xf32>
    %c0_17 = arith.constant 0 : index
    %c0_18 = arith.constant 0 : index
    %29 = vector.load %arg7[%c0_17, %c0_18] : memref<1x64xf32, #tpu.memory_space<vmem>>, vector<1x64xf32>
    %30 = vector.broadcast %29 : vector<1x64xf32> to vector<32x64xf32>
    %31 = arith.addf %28, %30 : vector<32x64xf32>
    %cst_19 = arith.constant 0.000000e+00 : f32
    %32 = vector.broadcast %cst_19 : f32 to vector<32x64xf32>
    %33 = arith.cmpf ogt, %31, %32 : vector<32x64xf32>
    %34 = math.exp %31 : vector<32x64xf32>
    %cst_20 = arith.constant 1.000000e+00 : f32
    %35 = vector.broadcast %cst_20 : f32 to vector<32x64xf32>
    %36 = arith.subf %34, %35 : vector<32x64xf32>
    %37 = arith.select %33, %31, %36 : vector<32x64xi1>, vector<32x64xf32>
    %c0_21 = arith.constant 0 : index
    %c0_22 = arith.constant 0 : index
    %38 = vector.load %arg8[%c0_21, %c0_22] : memref<1x64xbf16, #tpu.memory_space<vmem>>, vector<1x64xbf16>
    %39 = arith.extf %38 : vector<1x64xbf16> to vector<1x64xf32>
    %40 = vector.broadcast %39 : vector<1x64xf32> to vector<32x64xf32>
    %41 = arith.mulf %37, %40 : vector<32x64xf32>
    %cst_23 = arith.constant dense<0.000000e+00> : vector<32xf32>
    %42 = vector.multi_reduction <add>, %41, %cst_23 [1] : vector<32x64xf32> to vector<32xf32>
    %43 = vector.shape_cast %42 : vector<32xf32> to vector<32x1xf32>
    %44 = tpu.concatenate %3, %43 in 1 : vector<32x1xf32>, vector<32x1xf32> -> vector<32x2xf32>
    %c0_24 = arith.constant 0 : index
    %c0_25 = arith.constant 0 : index
    %45 = vector.load %arg9[%c0_24, %c0_25] : memref<32x2xf32, #tpu.memory_space<vmem>>, vector<32x2xf32>
    tpu.vector_store %arg9[%c0_24, %c0_25], %44 {strides = array<i32>} : memref<32x2xf32, #tpu.memory_space<vmem>>, vector<32x2xf32>,
    return
  }
  func.func @transform_0(%arg0: i32) -> (i32, i32) {
    %c0_i32 = arith.constant 0 : i32
    %c0_i32_0 = arith.constant 0 : i32
    return %arg0, %c0_i32 : i32, i32
  }
  func.func @transform_1(%arg0: i32) -> (i32, i32) {
    %c0_i32 = arith.constant 0 : i32
    %c0_i32_0 = arith.constant 0 : i32
    %c0_i32_1 = arith.constant 0 : i32
    return %c0_i32, %c0_i32_0 : i32, i32
  }
  func.func @transform_2(%arg0: i32) -> (i32, i32) {
    %c0_i32 = arith.constant 0 : i32
    %c0_i32_0 = arith.constant 0 : i32
    %c0_i32_1 = arith.constant 0 : i32
    return %c0_i32, %c0_i32_0 : i32, i32
  }
  func.func @transform_3(%arg0: i32) -> (i32, i32) {
    %c0_i32 = arith.constant 0 : i32
    %c0_i32_0 = arith.constant 0 : i32
    %c0_i32_1 = arith.constant 0 : i32
    return %c0_i32, %c0_i32_0 : i32, i32
  }
  func.func @transform_4(%arg0: i32) -> (i32, i32) {
    %c0_i32 = arith.constant 0 : i32
    %c0_i32_0 = arith.constant 0 : i32
    %c0_i32_1 = arith.constant 0 : i32
    return %c0_i32, %c0_i32_0 : i32, i32
  }
  func.func @transform_5(%arg0: i32) -> (i32, i32) {
    %c0_i32 = arith.constant 0 : i32
    %c0_i32_0 = arith.constant 0 : i32
    %c0_i32_1 = arith.constant 0 : i32
    return %c0_i32, %c0_i32_0 : i32, i32
  }
  func.func @transform_6(%arg0: i32) -> (i32, i32) {
    %c0_i32 = arith.constant 0 : i32
    %c0_i32_0 = arith.constant 0 : i32
    %c0_i32_1 = arith.constant 0 : i32
    return %c0_i32, %c0_i32_0 : i32, i32
  }
  func.func @transform_7(%arg0: i32) -> (i32, i32) {
    %c0_i32 = arith.constant 0 : i32
    %c0_i32_0 = arith.constant 0 : i32
    %c0_i32_1 = arith.constant 0 : i32
    return %c0_i32, %c0_i32_0 : i32, i32
  }
  func.func @transform_8(%arg0: i32) -> (i32, i32) {
    %c0_i32 = arith.constant 0 : i32
    %c0_i32_0 = arith.constant 0 : i32
    return %arg0, %c0_i32 : i32, i32
  }
}

</mosaic_0001>

<llo_original>
// kernel: tpu_custom_call.1
$region0: #{tpu_custom_call.1}
  #allocation0 [shape = 'u32[]', space=smem, size = 0x4, offset = 0x4, fixed_abs, tag = 'smem constant byte address 0x4 - core index']
  #allocation1 [shape = 'u32[144,128]{1,0:T(1,128)}', space=vmem, size = 0x12000, scoped, tag = 'internal scratch']
  %s0 = inlined_call_operand.vmem [shape: bf16[20,32], index: 0, kind: input, shape index: {}]
  %s1 = inlined_call_operand.vmem [shape: bf16[32,384], index: 1, kind: input, shape index: {}]
  %s2 = inlined_call_operand.vmem [shape: f32[1,256], index: 2, kind: input, shape index: {}]
  %s3 = inlined_call_operand.hbm [shape: bf16[256,128], index: 3, kind: input, shape index: {}]
  %s4 = inlined_call_operand.vmem [shape: f32[1,128], index: 4, kind: input, shape index: {}]
  %s5 = inlined_call_operand.vmem [shape: bf16[128,64], index: 5, kind: input, shape index: {}]
  %s6 = inlined_call_operand.vmem [shape: f32[1,64], index: 6, kind: input, shape index: {}]
  %s7 = inlined_call_operand.vmem [shape: bf16[1,64], index: 7, kind: input, shape index: {}]
  %s8 = inlined_call_operand.vmem [shape: f32[20,2], index: 8, kind: output, shape index: {}]
  %s9 = sld [smem:[#allocation0]]
  $region80: #{tpu_custom_call.1} parent=0
    _
  %s11 = ssub.s32 1, %s9
  %s12 = scalar_select 0, %s11, %s9
  $region1: #{tpu_custom_call.1} parent=0
    #allocation2 [shape = 'u8[65536]{0}', space=vmem, size = 0x10000, scoped, tag = 'input window, operand 3, single buffered']
    #allocation3 [shape = 's32[1]{0}', space=sflag, size = 0x4, scoped, tag = 'scoped memory for tpu_custom_call.1']
    #allocation4 [shape = 'u8[16384]{0}', space=vmem, size = 0x4000, scoped, tag = 'output window, operand 0, single buffered']
    %13 = vsyncpa [#allocation3], 0
    // Predicated region
    $region2: #{tpu_custom_call.1} parent=1 // pred_check
      _
    $region3: #{tpu_custom_call.1} parent=1 // pred_check_branch
      %15 = sbr.rel (0) target = $region5
    $region4: #{tpu_custom_call.1} parent=1 // pred_region
      _
    $region5: #{tpu_custom_call.1} parent=1 // pred_fallthru
      _
    // Predicated region
    $region6: #{tpu_custom_call.1} parent=1 // pred_check
      _
    $region7: #{tpu_custom_call.1} parent=1 // pred_check_branch
      %17 = sbr.rel (0) target = $region9
    $region8: #{tpu_custom_call.1} parent=1 // pred_region
      _
    $region9: #{tpu_custom_call.1} parent=1 // pred_fallthru
      _
    // Predicated region
    $region10: #{tpu_custom_call.1} parent=1 // pred_check
      _
    $region11: #{tpu_custom_call.1} parent=1 // pred_check_branch
      %19 = sbr.rel (0) target = $region13
    $region12: #{tpu_custom_call.1} parent=1 // pred_region
      _
    $region13: #{tpu_custom_call.1} parent=1 // pred_fallthru
      _
    // Predicated region
    $region14: #{tpu_custom_call.1} parent=1 // pred_check
      _
    $region15: #{tpu_custom_call.1} parent=1 // pred_check_branch
      %21 = sbr.rel (0) target = $region17
    $region16: #{tpu_custom_call.1} parent=1 // pred_region
      %s23 = ssub.s32 2048, 2048
      %24 = vsyncadd [#allocation3], %s23
      %s25 = sshll.u32 [#allocation2], 4
      %s26 = int_to_ptr.vmem [resolvable:$true] %s25
      %31 = dma.hbm_to_vmem [thread:$0]  %s3, 2048, %s26, [#allocation3], 64, 64, 4
    $region17: #{tpu_custom_call.1} parent=1 // pred_fallthru
      _
    // Predicated region
    $region18: #{tpu_custom_call.1} parent=1 // pred_check
      _
    $region19: #{tpu_custom_call.1} parent=1 // pred_check_branch
      %33 = sbr.rel (0) target = $region21
    $region20: #{tpu_custom_call.1} parent=1 // pred_region
      _
    $region21: #{tpu_custom_call.1} parent=1 // pred_fallthru
      _
    // Predicated region
    $region22: #{tpu_custom_call.1} parent=1 // pred_check
      _
    $region23: #{tpu_custom_call.1} parent=1 // pred_check_branch
      %35 = sbr.rel (0) target = $region25
    $region24: #{tpu_custom_call.1} parent=1 // pred_region
      _
    $region25: #{tpu_custom_call.1} parent=1 // pred_fallthru
      _
    // Predicated region
    $region26: #{tpu_custom_call.1} parent=1 // pred_check
      _
    $region27: #{tpu_custom_call.1} parent=1 // pred_check_branch
      %37 = sbr.rel (0) target = $region29
    $region28: #{tpu_custom_call.1} parent=1 // pred_region
      _
    $region29: #{tpu_custom_call.1} parent=1 // pred_fallthru
      _
    // Predicated region
    $region30: #{tpu_custom_call.1} parent=1 // pred_check
      _
    $region31: #{tpu_custom_call.1} parent=1 // pred_check_branch
      %39 = sbr.rel (0) target = $region33
    $region32: #{tpu_custom_call.1} parent=1 // pred_region
      _
    $region33: #{tpu_custom_call.1} parent=1 // pred_fallthru
      _
    // Predicated region
    $region34: #{tpu_custom_call.1} parent=1 // pred_check
      _
    $region35: #{tpu_custom_call.1} parent=1 // pred_check_branch
      %41 = sbr.rel (0) target = $region37
    $region36: #{tpu_custom_call.1} parent=1 // pred_region
      %42 = dma.done [#allocation3], 2048
    $region37: #{tpu_custom_call.1} parent=1 // pred_fallthru
      _
    %v44 = vld [vmem:[%s0] sm:$0xf]
    %v45 = vld [vmem:[%s0 + $0x4] sm:$0xf]
    %v46 = vld [vmem:[%s0 + $0x8] sm:$0xf]
    %v47 = vld [vmem:[%s0 + $0xc] sm:$0xf]
    %v48 = vld [vmem:[%s1] sm:$0xff]
    %v49 = vld [vmem:[%s1 + $0x8] sm:$0xf]
    %v50 = vld [vmem:[%s1 + $0xc] sm:$0xff]
    %v51 = vld [vmem:[%s1 + $0x14] sm:$0xf]
    %v52 = vld [vmem:[%s1 + $0x18] sm:$0xff]
    %v53 = vld [vmem:[%s1 + $0x20] sm:$0xf]
    %v54 = vld [vmem:[%s1 + $0x24] sm:$0xff]
    %v55 = vld [vmem:[%s1 + $0x2c] sm:$0xf]
    %v60 = vunpack.c.l.b16 %v44
    %v61 = vunpack.c.l.b16 %v45
    %v62 = vunpack.c.l.b16 %v46
    %v63 = vunpack.c.l.b16 %v47
    %v64 = vpack.c.b16 %v61, %v60
    %v65 = vpack.c.b16 %v63, %v62
    %v74 = vunpack.c.l.b16 %v48
    %v75 = vunpack.c.h.b16 %v48
    %v76 = vunpack.c.l.b16 %v49
    %v77 = vunpack.c.l.b16 %v50
    %v78 = vunpack.c.h.b16 %v50
    %v79 = vunpack.c.l.b16 %v51
    %v80 = vunpack.c.l.b16 %v52
    %v81 = vunpack.c.h.b16 %v52
    %v82 = vunpack.c.l.b16 %v53
    %v83 = vunpack.c.l.b16 %v54
    %v84 = vunpack.c.h.b16 %v54
    %v85 = vunpack.c.l.b16 %v55
    %v86 = vpack.c.b16 %v77, %v74
    %v87 = vpack.c.b16 %v78, %v75
    %v88 = vpack.c.b16 %v79, %v76
    %v89 = vpack.c.b16 %v83, %v80
    %v90 = vpack.c.b16 %v84, %v81
    %v91 = vpack.c.b16 %v85, %v82
    %vm98 = vcmask 261120
    %v100 = vsel %vm98, %v64, 0
    %v103 = vsel %vm98, %v65, 0
    %105 = vmatprep.subr.bf16.mxu0 %v87
    %106 = vmatpush1.bf16.msra.mxu0 %v86
    %107 = vmatprep.subr.bf16.mxu0 %v90
    %108 = vmatpush1.bf16.msra.mxu0 %v89
    %109 = vmatprep.subr.bf16.mxu0 0
    %110 = vmatpush1.bf16.msra.mxu0 0
    %111 = vmatprep.subr.bf16.mxu0 0
    %112 = vmatpush1.bf16.msra.mxu0 0
    %113 = vmatprep.subr.bf16.mxu0 0
    %114 = vmatpush1.bf16.msra.mxu0 0
    %115 = vmatprep.subr.bf16.mxu0 0
    %116 = vmatpush1.bf16.msra.mxu0 0
    %117 = vmatprep.subr.bf16.mxu0 0
    %118 = vmatpush1.bf16.msra.mxu0 0
    %119 = vmatprep.subr.bf16.mxu0 0
    %120 = vmatpush1.bf16.msra.mxu0 0
    %121 = vmatprep.subr.bf16.mxu0 0
    %122 = vmatpush1.bf16.msra.mxu0 0
    %123 = vmatprep.subr.bf16.mxu0 0
    %124 = vmatpush1.bf16.msra.mxu0 0
    %125 = vmatprep.subr.bf16.mxu0 0
    %126 = vmatpush1.bf16.msra.mxu0 0
    %127 = vmatprep.subr.bf16.mxu0 0
    %128 = vmatpush1.bf16.msra.mxu0 0
    %129 = vmatprep.subr.bf16.mxu0 0
    %130 = vmatpush1.bf16.msra.mxu0 0
    %131 = vmatprep.subr.bf16.mxu0 0
    %132 = vmatpush1.bf16.msra.mxu0 0
    %133 = vmatprep.subr.bf16.mxu0 0
    %134 = vmatpush1.bf16.msra.mxu0 0
    %135 = vmatprep.subr.bf16.mxu0 0
    %136 = vmatpush1.bf16.msra.mxu0 0
    %137 = vmatprep.mubr.bf16.mxu0 0
    %138 = vmatmul.mubr.bf16.gmra.mrb[0].mxu0 %v100
    %v139 = vpop.f32.mrb[0].mxu0
    %v140 = vadd.f32 0.0, %v139
    %v141 = vpop.f32.mrb[0].mxu0
    %v142 = vadd.f32 0.0, %v141
    %v143 = vpop.f32.mrb[0].mxu0
    %v144 = vadd.f32 0.0, %v143
    %v145 = vpop.f32.mrb[0].mxu0
    %v146 = vadd.f32 0.0, %v145
    %147 = vmatprep.mubr.bf16.mxu0 0
    %148 = vmatmul.mubr.bf16.gmra.mrb[0].mxu0 %v103
    %v149 = vpop.f32.mrb[0].mxu0
    %v150 = vadd.f32 0.0, %v149
    %v151 = vpop.f32.mrb[0].mxu0
    %v152 = vadd.f32 0.0, %v151
    %v153 = vpop.f32.mrb[0].mxu0
    %v154 = vadd.f32 0.0, %v153
    %v155 = vpop.f32.mrb[0].mxu0
    %v156 = vadd.f32 0.0, %v155
    %157 = vdwg.mxu0
    %158 = vmatprep.subr.bf16.mxu0 0
    %159 = vmatpush1.bf16.msra.mxu0 %v88
    %160 = vmatprep.subr.bf16.mxu0 0
    %161 = vmatpush1.bf16.msra.mxu0 %v91
    %162 = vmatprep.subr.bf16.mxu0 0
    %163 = vmatpush1.bf16.msra.mxu0 0
    %164 = vmatprep.subr.bf16.mxu0 0
    %165 = vmatpush1.bf16.msra.mxu0 0
    %166 = vmatprep.subr.bf16.mxu0 0
    %167 = vmatpush1.bf16.msra.mxu0 0
    %168 = vmatprep.subr.bf16.mxu0 0
    %169 = vmatpush1.bf16.msra.mxu0 0
    %170 = vmatprep.subr.bf16.mxu0 0
    %171 = vmatpush1.bf16.msra.mxu0 0
    %172 = vmatprep.subr.bf16.mxu0 0
    %173 = vmatpush1.bf16.msra.mxu0 0
    %174 = vmatprep.subr.bf16.mxu0 0
    %175 = vmatpush1.bf16.msra.mxu0 0
    %176 = vmatprep.subr.bf16.mxu0 0
    %177 = vmatpush1.bf16.msra.mxu0 0
    %178 = vmatprep.subr.bf16.mxu0 0
    %179 = vmatpush1.bf16.msra.mxu0 0
    %180 = vmatprep.subr.bf16.mxu0 0
    %181 = vmatpush1.bf16.msra.mxu0 0
    %182 = vmatprep.subr.bf16.mxu0 0
    %183 = vmatpush1.bf16.msra.mxu0 0
    %184 = vmatprep.subr.bf16.mxu0 0
    %185 = vmatpush1.bf16.msra.mxu0 0
    %186 = vmatprep.subr.bf16.mxu0 0
    %187 = vmatpush1.bf16.msra.mxu0 0
    %188 = vmatprep.subr.bf16.mxu0 0
    %189 = vmatpush1.bf16.msra.mxu0 0
    %190 = vmatprep.mubr.bf16.mxu0 0
    %191 = vmatmul.mubr.bf16.gmra.mrb[0].mxu0 %v100
    %v192 = vpop.f32.mrb[0].mxu0
    %v193 = vadd.f32 0.0, %v192
    %v194 = vpop.f32.mrb[0].mxu0
    %v195 = vpop.f32.mrb[0].mxu0
    %v196 = vadd.f32 0.0, %v195
    %v197 = vpop.f32.mrb[0].mxu0
    %198 = vmatprep.mubr.bf16.mxu0 0
    %199 = vmatmul.mubr.bf16.gmra.mrb[0].mxu0 %v103
    %v200 = vpop.f32.mrb[0].mxu0
    %v201 = vadd.f32 0.0, %v200
    %v202 = vpop.f32.mrb[0].mxu0
    %v203 = vpop.f32.mrb[0].mxu0
    %v204 = vadd.f32 0.0, %v203
    %v205 = vpop.f32.mrb[0].mxu0
    %206 = vdwg.mxu0
    %v207 = vld [vmem:[%s2] sm:$0x3]
    %v209 = vlaneseq
    %v210 = vshrl.u32 %v209, 7
    %v211 = vsub.s32 0, %v210
    %v212 = vrot.slane %v207, %v211
    %v213 = vlaneseq
    %v214 = vshrl.u32 %v213, 7
    %v215 = vsub.s32 1, %v214
    %v216 = vrot.slane %v207, %v215
    %v219 = vadd.f32 %v140, %v212
    %v220 = vadd.f32 %v142, %v216
    %v221 = vadd.f32 %v144, %v212
    %v222 = vadd.f32 %v146, %v216
    %v223 = vadd.f32 %v150, %v212
    %v224 = vadd.f32 %v152, %v216
    %v225 = vadd.f32 %v154, %v212
    %v226 = vadd.f32 %v156, %v216
    %vm227 = vcmp.gt.f32.partialorder %v219, 0.0
    %vm228 = vcmp.gt.f32.partialorder %v220, 0.0
    %vm229 = vcmp.gt.f32.partialorder %v221, 0.0
    %vm230 = vcmp.gt.f32.partialorder %v222, 0.0
    %vm231 = vcmp.gt.f32.partialorder %v223, 0.0
    %vm232 = vcmp.gt.f32.partialorder %v224, 0.0
    %vm233 = vcmp.gt.f32.partialorder %v225, 0.0
    %vm234 = vcmp.gt.f32.partialorder %v226, 0.0
    %v235 = vmul.f32 %v219, 1.442695
    %v236 = vpow.pop %v235
    %v237 = vmul.f32 %v220, 1.442695
    %v238 = vpow.pop %v237
    %v239 = vmul.f32 %v221, 1.442695
    %v240 = vpow.pop %v239
    %v241 = vmul.f32 %v222, 1.442695
    %v242 = vpow.pop %v241
    %v243 = vmul.f32 %v223, 1.442695
    %v244 = vpow.pop %v243
    %v245 = vmul.f32 %v224, 1.442695
    %v246 = vpow.pop %v245
    %v247 = vmul.f32 %v225, 1.442695
    %v248 = vpow.pop %v247
    %v249 = vmul.f32 %v226, 1.442695
    %v250 = vpow.pop %v249
    %v251 = vsub.f32 %v236, 1.0
    %v252 = vsub.f32 %v238, 1.0
    %v253 = vsub.f32 %v240, 1.0
    %v254 = vsub.f32 %v242, 1.0
    %v255 = vsub.f32 %v244, 1.0
    %v256 = vsub.f32 %v246, 1.0
    %v257 = vsub.f32 %v248, 1.0
    %v258 = vsub.f32 %v250, 1.0
    %v259 = vsel %vm227, %v219, %v251
    %v260 = vsel %vm228, %v220, %v252
    %v261 = vsel %vm229, %v221, %v253
    %v262 = vsel %vm230, %v222, %v254
    %v263 = vsel %vm231, %v223, %v255
    %v264 = vsel %vm232, %v224, %v256
    %v265 = vsel %vm233, %v225, %v257
    %v266 = vsel %vm234, %v226, %v258
    %v267 = vpack.c.bf16 %v261, %v259
    %v268 = vpack.c.bf16 %v262, %v260
    %v269 = vpack.c.bf16 %v265, %v263
    %v270 = vpack.c.bf16 %v266, %v264
    %v271 = vld [vmem:[#allocation2] sm:$0xf]
    %v272 = vld [vmem:[#allocation2 + $0x4] sm:$0xf]
    %v273 = vld [vmem:[#allocation2 + $0x8] sm:$0xf]
    %v274 = vld [vmem:[#allocation2 + $0xc] sm:$0xf]
    %v275 = vld [vmem:[#allocation2 + $0x10] sm:$0xf]
    %v276 = vld [vmem:[#allocation2 + $0x14] sm:$0xf]
    %v277 = vld [vmem:[#allocation2 + $0x18] sm:$0xf]
    %v278 = vld [vmem:[#allocation2 + $0x1c] sm:$0xf]
    %v279 = vld [vmem:[#allocation2 + $0x20] sm:$0xf]
    %v280 = vld [vmem:[#allocation2 + $0x24] sm:$0xf]
    %v281 = vld [vmem:[#allocation2 + $0x28] sm:$0xf]
    %v282 = vld [vmem:[#allocation2 + $0x2c] sm:$0xf]
    %v283 = vld [vmem:[#allocation2 + $0x30] sm:$0xf]
    %v284 = vld [vmem:[#allocation2 + $0x34] sm:$0xf]
    %v285 = vld [vmem:[#allocation2 + $0x38] sm:$0xf]
    %v286 = vld [vmem:[#allocation2 + $0x3c] sm:$0xf]
    %v287 = vld [vmem:[#allocation2 + $0x40] sm:$0xf]
    %v288 = vld [vmem:[#allocation2 + $0x44] sm:$0xf]
    %v289 = vld [vmem:[#allocation2 + $0x48] sm:$0xf]
    %v290 = vld [vmem:[#allocation2 + $0x4c] sm:$0xf]
    %v291 = vld [vmem:[#allocation2 + $0x50] sm:$0xf]
    %v292 = vld [vmem:[#allocation2 + $0x54] sm:$0xf]
    %v293 = vld [vmem:[#allocation2 + $0x58] sm:$0xf]
    %v294 = vld [vmem:[#allocation2 + $0x5c] sm:$0xf]
    %v295 = vld [vmem:[#allocation2 + $0x60] sm:$0xf]
    %v296 = vld [vmem:[#allocation2 + $0x64] sm:$0xf]
    %v297 = vld [vmem:[#allocation2 + $0x68] sm:$0xf]
    %v298 = vld [vmem:[#allocation2 + $0x6c] sm:$0xf]
    %v299 = vld [vmem:[#allocation2 + $0x70] sm:$0xf]
    %v300 = vld [vmem:[#allocation2 + $0x74] sm:$0xf]
    %v301 = vld [vmem:[#allocation2 + $0x78] sm:$0xf]
    %v302 = vld [vmem:[#allocation2 + $0x7c] sm:$0xf]
    %v303 = vld [vmem:[%s4] sm:$0x1]
    %v305 = vlaneseq
    %v306 = vshrl.u32 %v305, 7
    %v307 = vsub.s32 0, %v306
    %v308 = vrot.slane %v303, %v307
    %v342 = vunpack.c.l.b16 %v271
    %v343 = vunpack.c.l.b16 %v272
    %v344 = vunpack.c.l.b16 %v273
    %v345 = vunpack.c.l.b16 %v274
    %v346 = vunpack.c.l.b16 %v275
    %v347 = vunpack.c.l.b16 %v276
    %v348 = vunpack.c.l.b16 %v277
    %v349 = vunpack.c.l.b16 %v278
    %v350 = vunpack.c.l.b16 %v279
    %v351 = vunpack.c.l.b16 %v280
    %v352 = vunpack.c.l.b16 %v281
    %v353 = vunpack.c.l.b16 %v282
    %v354 = vunpack.c.l.b16 %v283
    %v355 = vunpack.c.l.b16 %v284
    %v356 = vunpack.c.l.b16 %v285
    %v357 = vunpack.c.l.b16 %v286
    %v358 = vunpack.c.l.b16 %v287
    %v359 = vunpack.c.l.b16 %v288
    %v360 = vunpack.c.l.b16 %v289
    %v361 = vunpack.c.l.b16 %v290
    %v362 = vunpack.c.l.b16 %v291
    %v363 = vunpack.c.l.b16 %v292
    %v364 = vunpack.c.l.b16 %v293
    %v365 = vunpack.c.l.b16 %v294
    %v366 = vunpack.c.l.b16 %v295
    %v367 = vunpack.c.l.b16 %v296
    %v368 = vunpack.c.l.b16 %v297
    %v369 = vunpack.c.l.b16 %v298
    %v370 = vunpack.c.l.b16 %v299
    %v371 = vunpack.c.l.b16 %v300
    %v372 = vunpack.c.l.b16 %v301
    %v373 = vunpack.c.l.b16 %v302
    %v374 = vpack.c.b16 %v343, %v342
    %v375 = vpack.c.b16 %v345, %v344
    %v376 = vpack.c.b16 %v347, %v346
    %v377 = vpack.c.b16 %v349, %v348
    %v378 = vpack.c.b16 %v351, %v350
    %v379 = vpack.c.b16 %v353, %v352
    %v380 = vpack.c.b16 %v355, %v354
    %v381 = vpack.c.b16 %v357, %v356
    %v382 = vpack.c.b16 %v359, %v358
    %v383 = vpack.c.b16 %v361, %v360
    %v384 = vpack.c.b16 %v363, %v362
    %v385 = vpack.c.b16 %v365, %v364
    %v386 = vpack.c.b16 %v367, %v366
    %v387 = vpack.c.b16 %v369, %v368
    %v388 = vpack.c.b16 %v371, %v370
    %v389 = vpack.c.b16 %v373, %v372
    %406 = vmatprep.subr.bf16.mxu0 0
    %407 = vmatpush1.bf16.msra.mxu0 %v374
    %408 = vmatprep.subr.bf16.mxu0 0
    %409 = vmatpush1.bf16.msra.mxu0 %v375
    %410 = vmatprep.subr.bf16.mxu0 0
    %411 = vmatpush1.bf16.msra.mxu0 %v376
    %412 = vmatprep.subr.bf16.mxu0 0
    %413 = vmatpush1.bf16.msra.mxu0 %v377
    %414 = vmatprep.subr.bf16.mxu0 0
    %415 = vmatpush1.bf16.msra.mxu0 %v378
    %416 = vmatprep.subr.bf16.mxu0 0
    %417 = vmatpush1.bf16.msra.mxu0 %v379
    %418 = vmatprep.subr.bf16.mxu0 0
    %419 = vmatpush1.bf16.msra.mxu0 %v380
    %420 = vmatprep.subr.bf16.mxu0 0
    %421 = vmatpush1.bf16.msra.mxu0 %v381
    %422 = vmatprep.subr.bf16.mxu0 0
    %423 = vmatpush1.bf16.msra.mxu0 %v382
    %424 = vmatprep.subr.bf16.mxu0 0
    %425 = vmatpush1.bf16.msra.mxu0 %v383
    %426 = vmatprep.subr.bf16.mxu0 0
    %427 = vmatpush1.bf16.msra.mxu0 %v384
    %428 = vmatprep.subr.bf16.mxu0 0
    %429 = vmatpush1.bf16.msra.mxu0 %v385
    %430 = vmatprep.subr.bf16.mxu0 0
    %431 = vmatpush1.bf16.msra.mxu0 %v386
    %432 = vmatprep.subr.bf16.mxu0 0
    %433 = vmatpush1.bf16.msra.mxu0 %v387
    %434 = vmatprep.subr.bf16.mxu0 0
    %435 = vmatpush1.bf16.msra.mxu0 %v388
    %436 = vmatprep.subr.bf16.mxu0 0
    %437 = vmatpush1.bf16.msra.mxu0 %v389
    %438 = vmatprep.mubr.bf16.mxu0 %v268
    %439 = vmatmul.mubr.bf16.gmra.mrb[0].mxu0 %v267
    %v440 = vpop.f32.mrb[0].mxu0
    %v441 = vadd.f32 %v308, %v440
    %v442 = vpop.f32.mrb[0].mxu0
    %v443 = vpop.f32.mrb[0].mxu0
    %v444 = vadd.f32 %v308, %v443
    %v445 = vpop.f32.mrb[0].mxu0
    %446 = vmatprep.mubr.bf16.mxu0 %v270
    %447 = vmatmul.mubr.bf16.gmra.mrb[0].mxu0 %v269
    %v448 = vpop.f32.mrb[0].mxu0
    %v449 = vadd.f32 %v308, %v448
    %v450 = vpop.f32.mrb[0].mxu0
    %v451 = vpop.f32.mrb[0].mxu0
    %v452 = vadd.f32 %v308, %v451
    %v453 = vpop.f32.mrb[0].mxu0
    %454 = vdwg.mxu0
    %vm455 = vcmp.gt.f32.partialorder %v441, 0.0
    %vm456 = vcmp.gt.f32.partialorder %v444, 0.0
    %vm457 = vcmp.gt.f32.partialorder %v449, 0.0
    %vm458 = vcmp.gt.f32.partialorder %v452, 0.0
    %v459 = vmul.f32 %v441, 1.442695
    %v460 = vpow.pop %v459
    %v461 = vmul.f32 %v444, 1.442695
    %v462 = vpow.pop %v461
    %v463 = vmul.f32 %v449, 1.442695
    %v464 = vpow.pop %v463
    %v465 = vmul.f32 %v452, 1.442695
    %v466 = vpow.pop %v465
    %v467 = vsub.f32 %v460, 1.0
    %v468 = vsub.f32 %v462, 1.0
    %v469 = vsub.f32 %v464, 1.0
    %v470 = vsub.f32 %v466, 1.0
    %v471 = vsel %vm455, %v441, %v467
    %v472 = vsel %vm456, %v444, %v468
    %v473 = vsel %vm457, %v449, %v469
    %v474 = vsel %vm458, %v452, %v470
    %v475 = vpack.c.bf16 %v472, %v471
    %v476 = vpack.c.bf16 %v474, %v473
    %v477 = vld [vmem:[%s5] sm:$0xf]
    %v478 = vld [vmem:[%s5 + $0x4] sm:$0xf]
    %v479 = vld [vmem:[%s5 + $0x8] sm:$0xf]
    %v480 = vld [vmem:[%s5 + $0xc] sm:$0xf]
    %v481 = vld [vmem:[%s5 + $0x10] sm:$0xf]
    %v482 = vld [vmem:[%s5 + $0x14] sm:$0xf]
    %v483 = vld [vmem:[%s5 + $0x18] sm:$0xf]
    %v484 = vld [vmem:[%s5 + $0x1c] sm:$0xf]
    %v485 = vld [vmem:[%s5 + $0x20] sm:$0xf]
    %v486 = vld [vmem:[%s5 + $0x24] sm:$0xf]
    %v487 = vld [vmem:[%s5 + $0x28] sm:$0xf]
    %v488 = vld [vmem:[%s5 + $0x2c] sm:$0xf]
    %v489 = vld [vmem:[%s5 + $0x30] sm:$0xf]
    %v490 = vld [vmem:[%s5 + $0x34] sm:$0xf]
    %v491 = vld [vmem:[%s5 + $0x38] sm:$0xf]
    %v492 = vld [vmem:[%s5 + $0x3c] sm:$0xf]
    %v493 = vld [vmem:[%s6] sm:$0x1]
    %v495 = vlaneseq
    %v496 = vshrl.u32 %v495, 7
    %v497 = vsub.s32 0, %v496
    %v498 = vrot.slane %v493, %v497
    %v516 = vunpack.c.l.b16 %v477
    %v517 = vunpack.c.l.b16 %v478
    %v518 = vunpack.c.l.b16 %v479
    %v519 = vunpack.c.l.b16 %v480
    %v520 = vunpack.c.l.b16 %v481
    %v521 = vunpack.c.l.b16 %v482
    %v522 = vunpack.c.l.b16 %v483
    %v523 = vunpack.c.l.b16 %v484
    %v524 = vunpack.c.l.b16 %v485
    %v525 = vunpack.c.l.b16 %v486
    %v526 = vunpack.c.l.b16 %v487
    %v527 = vunpack.c.l.b16 %v488
    %v528 = vunpack.c.l.b16 %v489
    %v529 = vunpack.c.l.b16 %v490
    %v530 = vunpack.c.l.b16 %v491
    %v531 = vunpack.c.l.b16 %v492
    %v532 = vpack.c.b16 %v517, %v516
    %v533 = vpack.c.b16 %v519, %v518
    %v534 = vpack.c.b16 %v521, %v520
    %v535 = vpack.c.b16 %v523, %v522
    %v536 = vpack.c.b16 %v525, %v524
    %v537 = vpack.c.b16 %v527, %v526
    %v538 = vpack.c.b16 %v529, %v528
    %v539 = vpack.c.b16 %v531, %v530
    %548 = vmatprep.subr.bf16.mxu0 0
    %549 = vmatpush1.bf16.msra.mxu0 %v532
    %550 = vmatprep.subr.bf16.mxu0 0
    %551 = vmatpush1.bf16.msra.mxu0 %v533
    %552 = vmatprep.subr.bf16.mxu0 0
    %553 = vmatpush1.bf16.msra.mxu0 %v534
    %554 = vmatprep.subr.bf16.mxu0 0
    %555 = vmatpush1.bf16.msra.mxu0 %v535
    %556 = vmatprep.subr.bf16.mxu0 0
    %557 = vmatpush1.bf16.msra.mxu0 %v536
    %558 = vmatprep.subr.bf16.mxu0 0
    %559 = vmatpush1.bf16.msra.mxu0 %v537
    %560 = vmatprep.subr.bf16.mxu0 0
    %561 = vmatpush1.bf16.msra.mxu0 %v538
    %562 = vmatprep.subr.bf16.mxu0 0
    %563 = vmatpush1.bf16.msra.mxu0 %v539
    %564 = vmatprep.subr.bf16.mxu0 0
    %565 = vmatpush1.bf16.msra.mxu0 0
    %566 = vmatprep.subr.bf16.mxu0 0
    %567 = vmatpush1.bf16.msra.mxu0 0
    %568 = vmatprep.subr.bf16.mxu0 0
    %569 = vmatpush1.bf16.msra.mxu0 0
    %570 = vmatprep.subr.bf16.mxu0 0
    %571 = vmatpush1.bf16.msra.mxu0 0
    %572 = vmatprep.subr.bf16.mxu0 0
    %573 = vmatpush1.bf16.msra.mxu0 0
    %574 = vmatprep.subr.bf16.mxu0 0
    %575 = vmatpush1.bf16.msra.mxu0 0
    %576 = vmatprep.subr.bf16.mxu0 0
    %577 = vmatpush1.bf16.msra.mxu0 0
    %578 = vmatprep.subr.bf16.mxu0 0
    %579 = vmatpush1.bf16.msra.mxu0 0
    %580 = vmatprep.mubr.bf16.mxu0 0
    %581 = vmatmul.mubr.bf16.gmra.mrb[0].mxu0 %v475
    %v582 = vpop.f32.mrb[0].mxu0
    %v583 = vadd.f32 %v498, %v582
    %v584 = vpop.f32.mrb[0].mxu0
    %v585 = vpop.f32.mrb[0].mxu0
    %v586 = vadd.f32 %v498, %v585
    %v587 = vpop.f32.mrb[0].mxu0
    %588 = vmatprep.mubr.bf16.mxu0 0
    %589 = vmatmul.mubr.bf16.gmra.mrb[0].mxu0 %v476
    %v590 = vpop.f32.mrb[0].mxu0
    %v591 = vadd.f32 %v498, %v590
    %v592 = vpop.f32.mrb[0].mxu0
    %v593 = vpop.f32.mrb[0].mxu0
    %v594 = vadd.f32 %v498, %v593
    %v595 = vpop.f32.mrb[0].mxu0
    %596 = vdwg.mxu0
    %vm597 = vcmp.gt.f32.partialorder %v583, 0.0
    %vm598 = vcmp.gt.f32.partialorder %v586, 0.0
    %vm599 = vcmp.gt.f32.partialorder %v591, 0.0
    %vm600 = vcmp.gt.f32.partialorder %v594, 0.0
    %v601 = vmul.f32 %v583, 1.442695
    %v602 = vpow.pop %v601
    %v603 = vmul.f32 %v586, 1.442695
    %v604 = vpow.pop %v603
    %v605 = vmul.f32 %v591, 1.442695
    %v606 = vpow.pop %v605
    %v607 = vmul.f32 %v594, 1.442695
    %v608 = vpow.pop %v607
    %v609 = vsub.f32 %v602, 1.0
    %v610 = vsub.f32 %v604, 1.0
    %v611 = vsub.f32 %v606, 1.0
    %v612 = vsub.f32 %v608, 1.0
    %v613 = vsel %vm597, %v583, %v609
    %v614 = vsel %vm598, %v586, %v610
    %v615 = vsel %vm599, %v591, %v611
    %v616 = vsel %vm600, %v594, %v612
    %v617 = vld [vmem:[%s7] sm:$0x1]
    %v618 = vunpack.c.l.bf16 %v617
    %v619 = vlaneseq
    %v620 = vshrl.u32 %v619, 7
    %v621 = vsub.s32 0, %v620
    %v622 = vrot.slane %v618, %v621
    %v623 = vmul.f32 %v613, %v622
    %v624 = vmul.f32 %v614, %v622
    %v625 = vmul.f32 %v615, %v622
    %v626 = vmul.f32 %v616, %v622
    %vm627 = vcmask 523264
    %v628 = vsel %vm627, %v623, 0.0
    %629 = vadd.xlane.f32.xlu0 %v628
    %v630 = vpop.xlane.xlu0 %629
    %v631 = vsel %vm627, %v624, 0.0
    %632 = vadd.xlane.f32.xlu0 %v631
    %v633 = vpop.xlane.xlu0 %632
    %v634 = vsel %vm627, %v625, 0.0
    %635 = vadd.xlane.f32.xlu0 %v634
    %v636 = vpop.xlane.xlu0 %635
    %v637 = vsel %vm627, %v626, 0.0
    %638 = vadd.xlane.f32.xlu0 %v637
    %v639 = vpop.xlane.xlu0 %638
    %vm640 = vcmask 7168
    %v641 = vsel %vm640, %v193, %v630
    %v642 = vsel %vm640, %v196, %v633
    %v643 = vsel %vm640, %v201, %v636
    %v644 = vsel %vm640, %v204, %v639
    %vm645 = vcmask 15360
    %646 = vst.msk [vmem:[#allocation4] sm:$0xff] %vm645, %v641
    %647 = vst.msk [vmem:[#allocation4 + $0x8] sm:$0xff] %vm645, %v642
    %648 = vst.msk [vmem:[#allocation4 + $0x10] sm:$0xff] %vm645, %v643
    %649 = vst.msk [vmem:[#allocation4 + $0x18] sm:$0xff] %vm645, %v644
    // Predicated region
    $region38: #{tpu_custom_call.1} parent=1 // pred_check
      _
    $region39: #{tpu_custom_call.1} parent=1 // pred_check_branch
      %651 = sbr.rel (0) target = $region41
    $region40: #{tpu_custom_call.1} parent=1 // pred_region
      // Predicated region
      $region42: #{tpu_custom_call.1} parent=40 // pred_check
        _
      $region43: #{tpu_custom_call.1} parent=40 // pred_check_branch
        %653 = sbr.rel (0) target = $region45
      $region44: #{tpu_custom_call.1} parent=40 // pred_region
        // Predicated region
        $region46: #{tpu_custom_call.1} parent=44 // pred_check
          _
        $region47: #{tpu_custom_call.1} parent=44 // pred_check_branch
          %655 = sbr.rel (0) target = $region49
        $region48: #{tpu_custom_call.1} parent=44 // pred_region
          // Predicated region
          $region61: #{tpu_custom_call.1} parent=48 // pred_check
            _
          $region62: #{tpu_custom_call.1} parent=48 // pred_check_branch
            %674 = sbr.rel (0) target = $region64
          $region63: #{tpu_custom_call.1} parent=48 // pred_region
            loop: start=0, step=1, limit=1
            $region65: #{tpu_custom_call.1} parent=63 // loop_pre_header
              _
            $region66: #{tpu_custom_call.1} parent=63 // loop_header
              %s676 = sphi 0, %s680
              %p677 = scmp.ge.s32.totalorder %s676, 1
              %s681 = sphi [#allocation4], [#allocation4]
              %s682 = sphi %s8, %s8
            $region67: #{tpu_custom_call.1} parent=63 // loop_header_branch
              %679 = sbr.rel (%p677) target = $region71
            $region68: #{tpu_custom_call.1} parent=63 // loop_body
              %v683 = vld [vmem:[%s681] sm:$0xff]
              %684 = vst [vmem:[%s682] sm:$0xff] %v683
              %v685 = vld [vmem:[%s681 + $0x8] sm:$0xff]
              %686 = vst [vmem:[%s682 + $0x8] sm:$0xff] %v685
              %v687 = vld [vmem:[%s681 + $0x10] sm:$0xff]
              %688 = vst [vmem:[%s682 + $0x10] sm:$0xff] %v687
            $region69: #{tpu_custom_call.1} parent=63 // loop_footer
              %s680 = sadd.s32 1, %s676
            $region70: #{tpu_custom_call.1} parent=63 // loop_footer_branch
              %675 = sbr.rel target = $region66
            $region71: #{tpu_custom_call.1} parent=63 // loop_exit
              _
          $region64: #{tpu_custom_call.1} parent=48 // pred_fallthru
            _
          // Predicated region
          $region72: #{tpu_custom_call.1} parent=48 // pred_check
            _
          $region73: #{tpu_custom_call.1} parent=48 // pred_check_branch
            %690 = sbr.rel target = $region75
          $region74: #{tpu_custom_call.1} parent=48 // pred_region
            _
          $region75: #{tpu_custom_call.1} parent=48 // pred_fallthru
            _
        $region49: #{tpu_custom_call.1} parent=44 // pred_fallthru
          _
        // Predicated region
        $region50: #{tpu_custom_call.1} parent=44 // pred_check
          _
        $region51: #{tpu_custom_call.1} parent=44 // pred_check_branch
          %657 = sbr.rel target = $region53
        $region52: #{tpu_custom_call.1} parent=44 // pred_region
          loop: start=0, step=1, limit=1
          $region54: #{tpu_custom_call.1} parent=52 // loop_pre_header
            _
          $region55: #{tpu_custom_call.1} parent=52 // loop_header
            %s660 = sphi 0, %s664
            %p661 = scmp.ge.s32.totalorder %s660, 1
            %s665 = sphi [#allocation4], [#allocation4]
            %s666 = sphi %s8, %s8
          $region56: #{tpu_custom_call.1} parent=52 // loop_header_branch
            %663 = sbr.rel (%p661) target = $region60
          $region57: #{tpu_custom_call.1} parent=52 // loop_body
            %v667 = vld [vmem:[%s665] sm:$0xff]
            %668 = vst [vmem:[%s666] sm:$0xff] %v667
            %v669 = vld [vmem:[%s665 + $0x8] sm:$0xff]
            %670 = vst [vmem:[%s666 + $0x8] sm:$0xff] %v669
            %v671 = vld [vmem:[%s665 + $0x10] sm:$0xff]
            %672 = vst [vmem:[%s666 + $0x10] sm:$0xff] %v671
          $region58: #{tpu_custom_call.1} parent=52 // loop_footer
            %s664 = sadd.s32 1, %s660
          $region59: #{tpu_custom_call.1} parent=52 // loop_footer_branch
            %659 = sbr.rel target = $region55
          $region60: #{tpu_custom_call.1} parent=52 // loop_exit
            _
        $region53: #{tpu_custom_call.1} parent=44 // pred_fallthru
          _
      $region45: #{tpu_custom_call.1} parent=40 // pred_fallthru
        _
      %691 = vnop
    $region41: #{tpu_custom_call.1} parent=1 // pred_fallthru
      _
    // Predicated region
    $region76: #{tpu_custom_call.1} parent=1 // pred_check
      _
    $region77: #{tpu_custom_call.1} parent=1 // pred_check_branch
      %693 = sbr.rel (0) target = $region79
    $region78: #{tpu_custom_call.1} parent=1 // pred_region
      _
    $region79: #{tpu_custom_call.1} parent=1 // pred_fallthru
      _
    %694 = vsyncpa [#allocation3], 1

// kernel: tpu_custom_call.1
$region0: #{tpu_custom_call.1}
  #allocation0 [shape = 'u32[]', space=smem, size = 0x4, offset = 0x4, fixed_abs, tag = 'smem constant byte address 0x4 - core index']
  #allocation1 [shape = 'u32[144,128]{1,0:T(1,128)}', space=vmem, size = 0x12000, scoped, tag = 'internal scratch']
  %s0 = inlined_call_operand.vmem [shape: bf16[20,32], index: 0, kind: input, shape index: {}]
  %s1 = inlined_call_operand.vmem [shape: bf16[32,384], index: 1, kind: input, shape index: {}]
  %s2 = inlined_call_operand.vmem [shape: f32[1,256], index: 2, kind: input, shape index: {}]
  %s3 = inlined_call_operand.hbm [shape: bf16[256,128], index: 3, kind: input, shape index: {}]
  %s4 = inlined_call_operand.vmem [shape: f32[1,128], index: 4, kind: input, shape index: {}]
  %s5 = inlined_call_operand.vmem [shape: bf16[128,64], index: 5, kind: input, shape index: {}]
  %s6 = inlined_call_operand.vmem [shape: f32[1,64], index: 6, kind: input, shape index: {}]
  %s7 = inlined_call_operand.vmem [shape: bf16[1,64], index: 7, kind: input, shape index: {}]
  %s8 = inlined_call_operand.vmem [shape: f32[20,2], index: 8, kind: output, shape index: {}]
  %s9 = sld [smem:[#allocation0]]
  $region80: #{tpu_custom_call.1} parent=0
    _
  %s11 = ssub.s32 1, %s9
  %s12 = scalar_select 0, %s11, %s9
  $region1: #{tpu_custom_call.1} parent=0
    #allocation2 [shape = 'u8[65536]{0}', space=vmem, size = 0x10000, scoped, tag = 'input window, operand 3, single buffered']
    #allocation3 [shape = 's32[1]{0}', space=sflag, size = 0x4, scoped, tag = 'scoped memory for tpu_custom_call.1']
    #allocation4 [shape = 'u8[16384]{0}', space=vmem, size = 0x4000, scoped, tag = 'output window, operand 0, single buffered']
    %13 = vsyncpa [#allocation3], 0
    // Predicated region
    $region2: #{tpu_custom_call.1} parent=1 // pred_check
      _
    $region3: #{tpu_custom_call.1} parent=1 // pred_check_branch
      %15 = sbr.rel (0) target = $region5
    $region4: #{tpu_custom_call.1} parent=1 // pred_region
      _
    $region5: #{tpu_custom_call.1} parent=1 // pred_fallthru
      _
    // Predicated region
    $region6: #{tpu_custom_call.1} parent=1 // pred_check
      _
    $region7: #{tpu_custom_call.1} parent=1 // pred_check_branch
      %17 = sbr.rel (0) target = $region9
    $region8: #{tpu_custom_call.1} parent=1 // pred_region
      _
    $region9: #{tpu_custom_call.1} parent=1 // pred_fallthru
      _
    // Predicated region
    $region10: #{tpu_custom_call.1} parent=1 // pred_check
      _
    $region11: #{tpu_custom_call.1} parent=1 // pred_check_branch
      %19 = sbr.rel (0) target = $region13
    $region12: #{tpu_custom_call.1} parent=1 // pred_region
      _
    $region13: #{tpu_custom_call.1} parent=1 // pred_fallthru
      _
    // Predicated region
    $region14: #{tpu_custom_call.1} parent=1 // pred_check
      _
    $region15: #{tpu_custom_call.1} parent=1 // pred_check_branch
      %21 = sbr.rel (0) target = $region17
    $region16: #{tpu_custom_call.1} parent=1 // pred_region
      %s23 = ssub.s32 2048, 2048
      %24 = vsyncadd [#allocation3], %s23
      %s25 = sshll.u32 [#allocation2], 4
      %s26 = int_to_ptr.vmem [resolvable:$true] %s25
      %31 = dma.hbm_to_vmem [thread:$0]  %s3, 2048, %s26, [#allocation3], 64, 64, 4
    $region17: #{tpu_custom_call.1} parent=1 // pred_fallthru
      _
    // Predicated region
    $region18: #{tpu_custom_call.1} parent=1 // pred_check
      _
    $region19: #{tpu_custom_call.1} parent=1 // pred_check_branch
      %33 = sbr.rel (0) target = $region21
    $region20: #{tpu_custom_call.1} parent=1 // pred_region
      _
    $region21: #{tpu_custom_call.1} parent=1 // pred_fallthru
      _
    // Predicated region
    $region22: #{tpu_custom_call.1} parent=1 // pred_check
      _
    $region23: #{tpu_custom_call.1} parent=1 // pred_check_branch
      %35 = sbr.rel (0) target = $region25
    $region24: #{tpu_custom_call.1} parent=1 // pred_region
      _
    $region25: #{tpu_custom_call.1} parent=1 // pred_fallthru
      _
    // Predicated region
    $region26: #{tpu_custom_call.1} parent=1 // pred_check
      _
    $region27: #{tpu_custom_call.1} parent=1 // pred_check_branch
      %37 = sbr.rel (0) target = $region29
    $region28: #{tpu_custom_call.1} parent=1 // pred_region
      _
    $region29: #{tpu_custom_call.1} parent=1 // pred_fallthru
      _
    // Predicated region
    $region30: #{tpu_custom_call.1} parent=1 // pred_check
      _
    $region31: #{tpu_custom_call.1} parent=1 // pred_check_branch
      %39 = sbr.rel (0) target = $region33
    $region32: #{tpu_custom_call.1} parent=1 // pred_region
      _
    $region33: #{tpu_custom_call.1} parent=1 // pred_fallthru
      _
    // Predicated region
    $region34: #{tpu_custom_call.1} parent=1 // pred_check
      _
    $region35: #{tpu_custom_call.1} parent=1 // pred_check_branch
      %41 = sbr.rel (0) target = $region37
    $region36: #{tpu_custom_call.1} parent=1 // pred_region
      %42 = dma.done [#allocation3], 2048
    $region37: #{tpu_custom_call.1} parent=1 // pred_fallthru
      _
    %v44 = vld [vmem:[%s0] sm:$0xf]
    %v45 = vld [vmem:[%s0 + $0x4] sm:$0xf]
    %v46 = vld [vmem:[%s0 + $0x8] sm:$0xf]
    %v47 = vld [vmem:[%s0 + $0xc] sm:$0xf]
    %v48 = vld [vmem:[%s1] sm:$0xff]
    %v49 = vld [vmem:[%s1 + $0x8] sm:$0xf]
    %v50 = vld [vmem:[%s1 + $0xc] sm:$0xff]
    %v51 = vld [vmem:[%s1 + $0x14] sm:$0xf]
    %v52 = vld [vmem:[%s1 + $0x18] sm:$0xff]
    %v53 = vld [vmem:[%s1 + $0x20] sm:$0xf]
    %v54 = vld [vmem:[%s1 + $0x24] sm:$0xff]
    %v55 = vld [vmem:[%s1 + $0x2c] sm:$0xf]
    %v60 = vunpack.c.l.b16 %v44
    %v61 = vunpack.c.l.b16 %v45
    %v62 = vunpack.c.l.b16 %v46
    %v63 = vunpack.c.l.b16 %v47
    %v64 = vpack.c.b16 %v61, %v60
    %v65 = vpack.c.b16 %v63, %v62
    %v74 = vunpack.c.l.b16 %v48
    %v75 = vunpack.c.h.b16 %v48
    %v76 = vunpack.c.l.b16 %v49
    %v77 = vunpack.c.l.b16 %v50
    %v78 = vunpack.c.h.b16 %v50
    %v79 = vunpack.c.l.b16 %v51
    %v80 = vunpack.c.l.b16 %v52
    %v81 = vunpack.c.h.b16 %v52
    %v82 = vunpack.c.l.b16 %v53
    %v83 = vunpack.c.l.b16 %v54
    %v84 = vunpack.c.h.b16 %v54
    %v85 = vunpack.c.l.b16 %v55
    %v86 = vpack.c.b16 %v77, %v74
    %v87 = vpack.c.b16 %v78, %v75
    %v88 = vpack.c.b16 %v79, %v76
    %v89 = vpack.c.b16 %v83, %v80
    %v90 = vpack.c.b16 %v84, %v81
    %v91 = vpack.c.b16 %v85, %v82
    %vm98 = vcmask 261120
    %v100 = vsel %vm98, %v64, 0
    %v103 = vsel %vm98, %v65, 0
    %105 = vmatprep.subr.bf16.mxu0 %v87
    %106 = vmatpush1.bf16.msra.mxu0 %v86
    %107 = vmatprep.subr.bf16.mxu0 %v90
    %108 = vmatpush1.bf16.msra.mxu0 %v89
    %109 = vmatprep.subr.bf16.mxu0 0
    %110 = vmatpush1.bf16.msra.mxu0 0
    %111 = vmatprep.subr.bf16.mxu0 0
    %112 = vmatpush1.bf16.msra.mxu0 0
    %113 = vmatprep.subr.bf16.mxu0 0
    %114 = vmatpush1.bf16.msra.mxu0 0
    %115 = vmatprep.subr.bf16.mxu0 0
    %116 = vmatpush1.bf16.msra.mxu0 0
    %117 = vmatprep.subr.bf16.mxu0 0
    %118 = vmatpush1.bf16.msra.mxu0 0
    %119 = vmatprep.subr.bf16.mxu0 0
    %120 = vmatpush1.bf16.msra.mxu0 0
    %121 = vmatprep.subr.bf16.mxu0 0
    %122 = vmatpush1.bf16.msra.mxu0 0
    %123 = vmatprep.subr.bf16.mxu0 0
    %124 = vmatpush1.bf16.msra.mxu0 0
    %125 = vmatprep.subr.bf16.mxu0 0
    %126 = vmatpush1.bf16.msra.mxu0 0
    %127 = vmatprep.subr.bf16.mxu0 0
    %128 = vmatpush1.bf16.msra.mxu0 0
    %129 = vmatprep.subr.bf16.mxu0 0
    %130 = vmatpush1.bf16.msra.mxu0 0
    %131 = vmatprep.subr.bf16.mxu0 0
    %132 = vmatpush1.bf16.msra.mxu0 0
    %133 = vmatprep.subr.bf16.mxu0 0
    %134 = vmatpush1.bf16.msra.mxu0 0
    %135 = vmatprep.subr.bf16.mxu0 0
    %136 = vmatpush1.bf16.msra.mxu0 0
    %137 = vmatprep.mubr.bf16.mxu0 0
    %138 = vmatmul.mubr.bf16.gmra.mrb[0].mxu0 %v100
    %v139 = vpop.f32.mrb[0].mxu0
    %v140 = vadd.f32 0.0, %v139
    %v141 = vpop.f32.mrb[0].mxu0
    %v142 = vadd.f32 0.0, %v141
    %v143 = vpop.f32.mrb[0].mxu0
    %v144 = vadd.f32 0.0, %v143
    %v145 = vpop.f32.mrb[0].mxu0
    %v146 = vadd.f32 0.0, %v145
    %147 = vmatprep.mubr.bf16.mxu0 0
    %148 = vmatmul.mubr.bf16.gmra.mrb[0].mxu0 %v103
    %v149 = vpop.f32.mrb[0].mxu0
    %v150 = vadd.f32 0.0, %v149
    %v151 = vpop.f32.mrb[0].mxu0
    %v152 = vadd.f32 0.0, %v151
    %v153 = vpop.f32.mrb[0].mxu0
    %v154 = vadd.f32 0.0, %v153
    %v155 = vpop.f32.mrb[0].mxu0
    %v156 = vadd.f32 0.0, %v155
    %157 = vdwg.mxu0
    %158 = vmatprep.subr.bf16.mxu0 0
    %159 = vmatpush1.bf16.msra.mxu0 %v88
    %160 = vmatprep.subr.bf16.mxu0 0
    %161 = vmatpush1.bf16.msra.mxu0 %v91
    %162 = vmatprep.subr.bf16.mxu0 0
    %163 = vmatpush1.bf16.msra.mxu0 0
    %164 = vmatprep.subr.bf16.mxu0 0
    %165 = vmatpush1.bf16.msra.mxu0 0
    %166 = vmatprep.subr.bf16.mxu0 0
    %167 = vmatpush1.bf16.msra.mxu0 0
    %168 = vmatprep.subr.bf16.mxu0 0
    %169 = vmatpush1.bf16.msra.mxu0 0
    %170 = vmatprep.subr.bf16.mxu0 0
    %171 = vmatpush1.bf16.msra.mxu0 0
    %172 = vmatprep.subr.bf16.mxu0 0
    %173 = vmatpush1.bf16.msra.mxu0 0
    %174 = vmatprep.subr.bf16.mxu0 0
    %175 = vmatpush1.bf16.msra.mxu0 0
    %176 = vmatprep.subr.bf16.mxu0 0
    %177 = vmatpush1.bf16.msra.mxu0 0
    %178 = vmatprep.subr.bf16.mxu0 0
    %179 = vmatpush1.bf16.msra.mxu0 0
    %180 = vmatprep.subr.bf16.mxu0 0
    %181 = vmatpush1.bf16.msra.mxu0 0
    %182 = vmatprep.subr.bf16.mxu0 0
    %183 = vmatpush1.bf16.msra.mxu0 0
    %184 = vmatprep.subr.bf16.mxu0 0
    %185 = vmatpush1.bf16.msra.mxu0 0
    %186 = vmatprep.subr.bf16.mxu0 0
    %187 = vmatpush1.bf16.msra.mxu0 0
    %188 = vmatprep.subr.bf16.mxu0 0
    %189 = vmatpush1.bf16.msra.mxu0 0
    %190 = vmatprep.mubr.bf16.mxu0 0
    %191 = vmatmul.mubr.bf16.gmra.mrb[0].mxu0 %v100
    %v192 = vpop.f32.mrb[0].mxu0
    %v193 = vadd.f32 0.0, %v192
    %v194 = vpop.f32.mrb[0].mxu0
    %v195 = vpop.f32.mrb[0].mxu0
    %v196 = vadd.f32 0.0, %v195
    %v197 = vpop.f32.mrb[0].mxu0
    %198 = vmatprep.mubr.bf16.mxu0 0
    %199 = vmatmul.mubr.bf16.gmra.mrb[0].mxu0 %v103
    %v200 = vpop.f32.mrb[0].mxu0
    %v201 = vadd.f32 0.0, %v200
    %v202 = vpop.f32.mrb[0].mxu0
    %v203 = vpop.f32.mrb[0].mxu0
    %v204 = vadd.f32 0.0, %v203
    %v205 = vpop.f32.mrb[0].mxu0
    %206 = vdwg.mxu0
    %v207 = vld [vmem:[%s2] sm:$0x3]
    %v209 = vlaneseq
    %v210 = vshrl.u32 %v209, 7
    %v211 = vsub.s32 0, %v210
    %v212 = vrot.slane %v207, %v211
    %v213 = vlaneseq
    %v214 = vshrl.u32 %v213, 7
    %v215 = vsub.s32 1, %v214
    %v216 = vrot.slane %v207, %v215
    %v219 = vadd.f32 %v140, %v212
    %v220 = vadd.f32 %v142, %v216
    %v221 = vadd.f32 %v144, %v212
    %v222 = vadd.f32 %v146, %v216
    %v223 = vadd.f32 %v150, %v212
    %v224 = vadd.f32 %v152, %v216
    %v225 = vadd.f32 %v154, %v212
    %v226 = vadd.f32 %v156, %v216
    %vm227 = vcmp.gt.f32.partialorder %v219, 0.0
    %vm228 = vcmp.gt.f32.partialorder %v220, 0.0
    %vm229 = vcmp.gt.f32.partialorder %v221, 0.0
    %vm230 = vcmp.gt.f32.partialorder %v222, 0.0
    %vm231 = vcmp.gt.f32.partialorder %v223, 0.0
    %vm232 = vcmp.gt.f32.partialorder %v224, 0.0
    %vm233 = vcmp.gt.f32.partialorder %v225, 0.0
    %vm234 = vcmp.gt.f32.partialorder %v226, 0.0
    %v235 = vmul.f32 %v219, 1.442695
    %v236 = vpow.pop %v235
    %v237 = vmul.f32 %v220, 1.442695
    %v238 = vpow.pop %v237
    %v239 = vmul.f32 %v221, 1.442695
    %v240 = vpow.pop %v239
    %v241 = vmul.f32 %v222, 1.442695
    %v242 = vpow.pop %v241
    %v243 = vmul.f32 %v223, 1.442695
    %v244 = vpow.pop %v243
    %v245 = vmul.f32 %v224, 1.442695
    %v246 = vpow.pop %v245
    %v247 = vmul.f32 %v225, 1.442695
    %v248 = vpow.pop %v247
    %v249 = vmul.f32 %v226, 1.442695
    %v250 = vpow.pop %v249
    %v251 = vsub.f32 %v236, 1.0
    %v252 = vsub.f32 %v238, 1.0
    %v253 = vsub.f32 %v240, 1.0
    %v254 = vsub.f32 %v242, 1.0
    %v255 = vsub.f32 %v244, 1.0
    %v256 = vsub.f32 %v246, 1.0
    %v257 = vsub.f32 %v248, 1.0
    %v258 = vsub.f32 %v250, 1.0
    %v259 = vsel %vm227, %v219, %v251
    %v260 = vsel %vm228, %v220, %v252
    %v261 = vsel %vm229, %v221, %v253
    %v262 = vsel %vm230, %v222, %v254
    %v263 = vsel %vm231, %v223, %v255
    %v264 = vsel %vm232, %v224, %v256
    %v265 = vsel %vm233, %v225, %v257
    %v266 = vsel %vm234, %v226, %v258
    %v267 = vpack.c.bf16 %v261, %v259
    %v268 = vpack.c.bf16 %v262, %v260
    %v269 = vpack.c.bf16 %v265, %v263
    %v270 = vpack.c.bf16 %v266, %v264
    %v271 = vld [vmem:[#allocation2] sm:$0xf]
    %v272 = vld [vmem:[#allocation2 + $0x4] sm:$0xf]
    %v273 = vld [vmem:[#allocation2 + $0x8] sm:$0xf]
    %v274 = vld [vmem:[#allocation2 + $0xc] sm:$0xf]
    %v275 = vld [vmem:[#allocation2 + $0x10] sm:$0xf]
    %v276 = vld [vmem:[#allocation2 + $0x14] sm:$0xf]
    %v277 = vld [vmem:[#allocation2 + $0x18] sm:$0xf]
    %v278 = vld [vmem:[#allocation2 + $0x1c] sm:$0xf]
    %v279 = vld [vmem:[#allocation2 + $0x20] sm:$0xf]
    %v280 = vld [vmem:[#allocation2 + $0x24] sm:$0xf]
    %v281 = vld [vmem:[#allocation2 + $0x28] sm:$0xf]
    %v282 = vld [vmem:[#allocation2 + $0x2c] sm:$0xf]
    %v283 = vld [vmem:[#allocation2 + $0x30] sm:$0xf]
    %v284 = vld [vmem:[#allocation2 + $0x34] sm:$0xf]
    %v285 = vld [vmem:[#allocation2 + $0x38] sm:$0xf]
    %v286 = vld [vmem:[#allocation2 + $0x3c] sm:$0xf]
    %v287 = vld [vmem:[#allocation2 + $0x40] sm:$0xf]
    %v288 = vld [vmem:[#allocation2 + $0x44] sm:$0xf]
    %v289 = vld [vmem:[#allocation2 + $0x48] sm:$0xf]
    %v290 = vld [vmem:[#allocation2 + $0x4c] sm:$0xf]
    %v291 = vld [vmem:[#allocation2 + $0x50] sm:$0xf]
    %v292 = vld [vmem:[#allocation2 + $0x54] sm:$0xf]
    %v293 = vld [vmem:[#allocation2 + $0x58] sm:$0xf]
    %v294 = vld [vmem:[#allocation2 + $0x5c] sm:$0xf]
    %v295 = vld [vmem:[#allocation2 + $0x60] sm:$0xf]
    %v296 = vld [vmem:[#allocation2 + $0x64] sm:$0xf]
    %v297 = vld [vmem:[#allocation2 + $0x68] sm:$0xf]
    %v298 = vld [vmem:[#allocation2 + $0x6c] sm:$0xf]
    %v299 = vld [vmem:[#allocation2 + $0x70] sm:$0xf]
    %v300 = vld [vmem:[#allocation2 + $0x74] sm:$0xf]
    %v301 = vld [vmem:[#allocation2 + $0x78] sm:$0xf]
    %v302 = vld [vmem:[#allocation2 + $0x7c] sm:$0xf]
    %v303 = vld [vmem:[%s4] sm:$0x1]
    %v305 = vlaneseq
    %v306 = vshrl.u32 %v305, 7
    %v307 = vsub.s32 0, %v306
    %v308 = vrot.slane %v303, %v307
    %v342 = vunpack.c.l.b16 %v271
    %v343 = vunpack.c.l.b16 %v272
    %v344 = vunpack.c.l.b16 %v273
    %v345 = vunpack.c.l.b16 %v274
    %v346 = vunpack.c.l.b16 %v275
    %v347 = vunpack.c.l.b16 %v276
    %v348 = vunpack.c.l.b16 %v277
    %v349 = vunpack.c.l.b16 %v278
    %v350 = vunpack.c.l.b16 %v279
    %v351 = vunpack.c.l.b16 %v280
    %v352 = vunpack.c.l.b16 %v281
    %v353 = vunpack.c.l.b16 %v282
    %v354 = vunpack.c.l.b16 %v283
    %v355 = vunpack.c.l.b16 %v284
    %v356 = vunpack.c.l.b16 %v285
    %v357 = vunpack.c.l.b16 %v286
    %v358 = vunpack.c.l.b16 %v287
    %v359 = vunpack.c.l.b16 %v288
    %v360 = vunpack.c.l.b16 %v289
    %v361 = vunpack.c.l.b16 %v290
    %v362 = vunpack.c.l.b16 %v291
    %v363 = vunpack.c.l.b16 %v292
    %v364 = vunpack.c.l.b16 %v293
    %v365 = vunpack.c.l.b16 %v294
    %v366 = vunpack.c.l.b16 %v295
    %v367 = vunpack.c.l.b16 %v296
    %v368 = vunpack.c.l.b16 %v297
    %v369 = vunpack.c.l.b16 %v298
    %v370 = vunpack.c.l.b16 %v299
    %v371 = vunpack.c.l.b16 %v300
    %v372 = vunpack.c.l.b16 %v301
    %v373 = vunpack.c.l.b16 %v302
    %v374 = vpack.c.b16 %v343, %v342
    %v375 = vpack.c.b16 %v345, %v344
    %v376 = vpack.c.b16 %v347, %v346
    %v377 = vpack.c.b16 %v349, %v348
    %v378 = vpack.c.b16 %v351, %v350
    %v379 = vpack.c.b16 %v353, %v352
    %v380 = vpack.c.b16 %v355, %v354
    %v381 = vpack.c.b16 %v357, %v356
    %v382 = vpack.c.b16 %v359, %v358
    %v383 = vpack.c.b16 %v361, %v360
    %v384 = vpack.c.b16 %v363, %v362
    %v385 = vpack.c.b16 %v365, %v364
    %v386 = vpack.c.b16 %v367, %v366
    %v387 = vpack.c.b16 %v369, %v368
    %v388 = vpack.c.b16 %v371, %v370
    %v389 = vpack.c.b16 %v373, %v372
    %406 = vmatprep.subr.bf16.mxu0 0
    %407 = vmatpush1.bf16.msra.mxu0 %v374
    %408 = vmatprep.subr.bf16.mxu0 0
    %409 = vmatpush1.bf16.msra.mxu0 %v375
    %410 = vmatprep.subr.bf16.mxu0 0
    %411 = vmatpush1.bf16.msra.mxu0 %v376
    %412 = vmatprep.subr.bf16.mxu0 0
    %413 = vmatpush1.bf16.msra.mxu0 %v377
    %414 = vmatprep.subr.bf16.mxu0 0
    %415 = vmatpush1.bf16.msra.mxu0 %v378
    %416 = vmatprep.subr.bf16.mxu0 0
    %417 = vmatpush1.bf16.msra.mxu0 %v379
    %418 = vmatprep.subr.bf16.mxu0 0
    %419 = vmatpush1.bf16.msra.mxu0 %v380
    %420 = vmatprep.subr.bf16.mxu0 0
    %421 = vmatpush1.bf16.msra.mxu0 %v381
    %422 = vmatprep.subr.bf16.mxu0 0
    %423 = vmatpush1.bf16.msra.mxu0 %v382
    %424 = vmatprep.subr.bf16.mxu0 0
    %425 = vmatpush1.bf16.msra.mxu0 %v383
    %426 = vmatprep.subr.bf16.mxu0 0
    %427 = vmatpush1.bf16.msra.mxu0 %v384
    %428 = vmatprep.subr.bf16.mxu0 0
    %429 = vmatpush1.bf16.msra.mxu0 %v385
    %430 = vmatprep.subr.bf16.mxu0 0
    %431 = vmatpush1.bf16.msra.mxu0 %v386
    %432 = vmatprep.subr.bf16.mxu0 0
    %433 = vmatpush1.bf16.msra.mxu0 %v387
    %434 = vmatprep.subr.bf16.mxu0 0
    %435 = vmatpush1.bf16.msra.mxu0 %v388
    %436 = vmatprep.subr.bf16.mxu0 0
    %437 = vmatpush1.bf16.msra.mxu0 %v389
    %438 = vmatprep.mubr.bf16.mxu0 %v268
    %439 = vmatmul.mubr.bf16.gmra.mrb[0].mxu0 %v267
    %v440 = vpop.f32.mrb[0].mxu0
    %v441 = vadd.f32 %v308, %v440
    %v442 = vpop.f32.mrb[0].mxu0
    %v443 = vpop.f32.mrb[0].mxu0
    %v444 = vadd.f32 %v308, %v443
    %v445 = vpop.f32.mrb[0].mxu0
    %446 = vmatprep.mubr.bf16.mxu0 %v270
    %447 = vmatmul.mubr.bf16.gmra.mrb[0].mxu0 %v269
    %v448 = vpop.f32.mrb[0].mxu0
    %v449 = vadd.f32 %v308, %v448
    %v450 = vpop.f32.mrb[0].mxu0
    %v451 = vpop.f32.mrb[0].mxu0
    %v452 = vadd.f32 %v308, %v451
    %v453 = vpop.f32.mrb[0].mxu0
    %454 = vdwg.mxu0
    %vm455 = vcmp.gt.f32.partialorder %v441, 0.0
    %vm456 = vcmp.gt.f32.partialorder %v444, 0.0
    %vm457 = vcmp.gt.f32.partialorder %v449, 0.0
    %vm458 = vcmp.gt.f32.partialorder %v452, 0.0
    %v459 = vmul.f32 %v441, 1.442695
    %v460 = vpow.pop %v459
    %v461 = vmul.f32 %v444, 1.442695
    %v462 = vpow.pop %v461
    %v463 = vmul.f32 %v449, 1.442695
    %v464 = vpow.pop %v463
    %v465 = vmul.f32 %v452, 1.442695
    %v466 = vpow.pop %v465
    %v467 = vsub.f32 %v460, 1.0
    %v468 = vsub.f32 %v462, 1.0
    %v469 = vsub.f32 %v464, 1.0
    %v470 = vsub.f32 %v466, 1.0
    %v471 = vsel %vm455, %v441, %v467
    %v472 = vsel %vm456, %v444, %v468
    %v473 = vsel %vm457, %v449, %v469
    %v474 = vsel %vm458, %v452, %v470
    %v475 = vpack.c.bf16 %v472, %v471
    %v476 = vpack.c.bf16 %v474, %v473
    %v477 = vld [vmem:[%s5] sm:$0xf]
    %v478 = vld [vmem:[%s5 + $0x4] sm:$0xf]
    %v479 = vld [vmem:[%s5 + $0x8] sm:$0xf]
    %v480 = vld [vmem:[%s5 + $0xc] sm:$0xf]
    %v481 = vld [vmem:[%s5 + $0x10] sm:$0xf]
    %v482 = vld [vmem:[%s5 + $0x14] sm:$0xf]
    %v483 = vld [vmem:[%s5 + $0x18] sm:$0xf]
    %v484 = vld [vmem:[%s5 + $0x1c] sm:$0xf]
    %v485 = vld [vmem:[%s5 + $0x20] sm:$0xf]
    %v486 = vld [vmem:[%s5 + $0x24] sm:$0xf]
    %v487 = vld [vmem:[%s5 + $0x28] sm:$0xf]
    %v488 = vld [vmem:[%s5 + $0x2c] sm:$0xf]
    %v489 = vld [vmem:[%s5 + $0x30] sm:$0xf]
    %v490 = vld [vmem:[%s5 + $0x34] sm:$0xf]
    %v491 = vld [vmem:[%s5 + $0x38] sm:$0xf]
    %v492 = vld [vmem:[%s5 + $0x3c] sm:$0xf]
    %v493 = vld [vmem:[%s6] sm:$0x1]
    %v495 = vlaneseq
    %v496 = vshrl.u32 %v495, 7
    %v497 = vsub.s32 0, %v496
    %v498 = vrot.slane %v493, %v497
    %v516 = vunpack.c.l.b16 %v477
    %v517 = vunpack.c.l.b16 %v478
    %v518 = vunpack.c.l.b16 %v479
    %v519 = vunpack.c.l.b16 %v480
    %v520 = vunpack.c.l.b16 %v481
    %v521 = vunpack.c.l.b16 %v482
    %v522 = vunpack.c.l.b16 %v483
    %v523 = vunpack.c.l.b16 %v484
    %v524 = vunpack.c.l.b16 %v485
    %v525 = vunpack.c.l.b16 %v486
    %v526 = vunpack.c.l.b16 %v487
    %v527 = vunpack.c.l.b16 %v488
    %v528 = vunpack.c.l.b16 %v489
    %v529 = vunpack.c.l.b16 %v490
    %v530 = vunpack.c.l.b16 %v491
    %v531 = vunpack.c.l.b16 %v492
    %v532 = vpack.c.b16 %v517, %v516
    %v533 = vpack.c.b16 %v519, %v518
    %v534 = vpack.c.b16 %v521, %v520
    %v535 = vpack.c.b16 %v523, %v522
    %v536 = vpack.c.b16 %v525, %v524
    %v537 = vpack.c.b16 %v527, %v526
    %v538 = vpack.c.b16 %v529, %v528
    %v539 = vpack.c.b16 %v531, %v530
    %548 = vmatprep.subr.bf16.mxu0 0
    %549 = vmatpush1.bf16.msra.mxu0 %v532
    %550 = vmatprep.subr.bf16.mxu0 0
    %551 = vmatpush1.bf16.msra.mxu0 %v533
    %552 = vmatprep.subr.bf16.mxu0 0
    %553 = vmatpush1.bf16.msra.mxu0 %v534
    %554 = vmatprep.subr.bf16.mxu0 0
    %555 = vmatpush1.bf16.msra.mxu0 %v535
    %556 = vmatprep.subr.bf16.mxu0 0
    %557 = vmatpush1.bf16.msra.mxu0 %v536
    %558 = vmatprep.subr.bf16.mxu0 0
    %559 = vmatpush1.bf16.msra.mxu0 %v537
    %560 = vmatprep.subr.bf16.mxu0 0
    %561 = vmatpush1.bf16.msra.mxu0 %v538
    %562 = vmatprep.subr.bf16.mxu0 0
    %563 = vmatpush1.bf16.msra.mxu0 %v539
    %564 = vmatprep.subr.bf16.mxu0 0
    %565 = vmatpush1.bf16.msra.mxu0 0
    %566 = vmatprep.subr.bf16.mxu0 0
    %567 = vmatpush1.bf16.msra.mxu0 0
    %568 = vmatprep.subr.bf16.mxu0 0
    %569 = vmatpush1.bf16.msra.mxu0 0
    %570 = vmatprep.subr.bf16.mxu0 0
    %571 = vmatpush1.bf16.msra.mxu0 0
    %572 = vmatprep.subr.bf16.mxu0 0
    %573 = vmatpush1.bf16.msra.mxu0 0
    %574 = vmatprep.subr.bf16.mxu0 0
    %575 = vmatpush1.bf16.msra.mxu0 0
    %576 = vmatprep.subr.bf16.mxu0 0
    %577 = vmatpush1.bf16.msra.mxu0 0
    %578 = vmatprep.subr.bf16.mxu0 0
    %579 = vmatpush1.bf16.msra.mxu0 0
    %580 = vmatprep.mubr.bf16.mxu0 0
    %581 = vmatmul.mubr.bf16.gmra.mrb[0].mxu0 %v475
    %v582 = vpop.f32.mrb[0].mxu0
    %v583 = vadd.f32 %v498, %v582
    %v584 = vpop.f32.mrb[0].mxu0
    %v585 = vpop.f32.mrb[0].mxu0
    %v586 = vadd.f32 %v498, %v585
    %v587 = vpop.f32.mrb[0].mxu0
    %588 = vmatprep.mubr.bf16.mxu0 0
    %589 = vmatmul.mubr.bf16.gmra.mrb[0].mxu0 %v476
    %v590 = vpop.f32.mrb[0].mxu0
    %v591 = vadd.f32 %v498, %v590
    %v592 = vpop.f32.mrb[0].mxu0
    %v593 = vpop.f32.mrb[0].mxu0
    %v594 = vadd.f32 %v498, %v593
    %v595 = vpop.f32.mrb[0].mxu0
    %596 = vdwg.mxu0
    %vm597 = vcmp.gt.f32.partialorder %v583, 0.0
    %vm598 = vcmp.gt.f32.partialorder %v586, 0.0
    %vm599 = vcmp.gt.f32.partialorder %v591, 0.0
    %vm600 = vcmp.gt.f32.partialorder %v594, 0.0
    %v601 = vmul.f32 %v583, 1.442695
    %v602 = vpow.pop %v601
    %v603 = vmul.f32 %v586, 1.442695
    %v604 = vpow.pop %v603
    %v605 = vmul.f32 %v591, 1.442695
    %v606 = vpow.pop %v605
    %v607 = vmul.f32 %v594, 1.442695
    %v608 = vpow.pop %v607
    %v609 = vsub.f32 %v602, 1.0
    %v610 = vsub.f32 %v604, 1.0
    %v611 = vsub.f32 %v606, 1.0
    %v612 = vsub.f32 %v608, 1.0
    %v613 = vsel %vm597, %v583, %v609
    %v614 = vsel %vm598, %v586, %v610
    %v615 = vsel %vm599, %v591, %v611
    %v616 = vsel %vm600, %v594, %v612
    %v617 = vld [vmem:[%s7] sm:$0x1]
    %v618 = vunpack.c.l.bf16 %v617
    %v619 = vlaneseq
    %v620 = vshrl.u32 %v619, 7
    %v621 = vsub.s32 0, %v620
    %v622 = vrot.slane %v618, %v621
    %v623 = vmul.f32 %v613, %v622
    %v624 = vmul.f32 %v614, %v622
    %v625 = vmul.f32 %v615, %v622
    %v626 = vmul.f32 %v616, %v622
    %vm627 = vcmask 523264
    %v628 = vsel %vm627, %v623, 0.0
    %629 = vadd.xlane.f32.xlu0 %v628
    %v630 = vpop.xlane.xlu0 %629
    %v631 = vsel %vm627, %v624, 0.0
    %632 = vadd.xlane.f32.xlu0 %v631
    %v633 = vpop.xlane.xlu0 %632
    %v634 = vsel %vm627, %v625, 0.0
    %635 = vadd.xlane.f32.xlu0 %v634
    %v636 = vpop.xlane.xlu0 %635
    %v637 = vsel %vm627, %v626, 0.0
    %638 = vadd.xlane.f32.xlu0 %v637
    %v639 = vpop.xlane.xlu0 %638
    %vm640 = vcmask 7168
    %v641 = vsel %vm640, %v193, %v630
    %v642 = vsel %vm640, %v196, %v633
    %v643 = vsel %vm640, %v201, %v636
    %v644 = vsel %vm640, %v204, %v639
    %vm645 = vcmask 15360
    %646 = vst.msk [vmem:[#allocation4] sm:$0xff] %vm645, %v641
    %647 = vst.msk [vmem:[#allocation4 + $0x8] sm:$0xff] %vm645, %v642
    %648 = vst.msk [vmem:[#allocation4 + $0x10] sm:$0xff] %vm645, %v643
    %649 = vst.msk [vmem:[#allocation4 + $0x18] sm:$0xff] %vm645, %v644
    // Predicated region
    $region38: #{tpu_custom_call.1} parent=1 // pred_check
      _
    $region39: #{tpu_custom_call.1} parent=1 // pred_check_branch
      %651 = sbr.rel (0) target = $region41
    $region40: #{tpu_custom_call.1} parent=1 // pred_region
      // Predicated region
      $region42: #{tpu_custom_call.1} parent=40 // pred_check
        _
      $region43: #{tpu_custom_call.1} parent=40 // pred_check_branch
        %653 = sbr.rel (0) target = $region45
      $region44: #{tpu_custom_call.1} parent=40 // pred_region
        // Predicated region
        $region46: #{tpu_custom_call.1} parent=44 // pred_check
          _
        $region47: #{tpu_custom_call.1} parent=44 // pred_check_branch
          %655 = sbr.rel (0) target = $region49
        $region48: #{tpu_custom_call.1} parent=44 // pred_region
          // Predicated region
          $region61: #{tpu_custom_call.1} parent=48 // pred_check
            _
          $region62: #{tpu_custom_call.1} parent=48 // pred_check_branch
            %674 = sbr.rel (0) target = $region64
          $region63: #{tpu_custom_call.1} parent=48 // pred_region
            loop: start=0, step=1, limit=1
            $region65: #{tpu_custom_call.1} parent=63 // loop_pre_header
              _
            $region66: #{tpu_custom_call.1} parent=63 // loop_header
              %s676 = sphi 0, %s680
              %p677 = scmp.ge.s32.totalorder %s676, 1
              %s681 = sphi [#allocation4], [#allocation4]
              %s682 = sphi %s8, %s8
            $region67: #{tpu_custom_call.1} parent=63 // loop_header_branch
              %679 = sbr.rel (%p677) target = $region71
            $region68: #{tpu_custom_call.1} parent=63 // loop_body
              %v683 = vld [vmem:[%s681] sm:$0xff]
              %684 = vst [vmem:[%s682] sm:$0xff] %v683
              %v685 = vld [vmem:[%s681 + $0x8] sm:$0xff]
              %686 = vst [vmem:[%s682 + $0x8] sm:$0xff] %v685
              %v687 = vld [vmem:[%s681 + $0x10] sm:$0xff]
              %688 = vst [vmem:[%s682 + $0x10] sm:$0xff] %v687
            $region69: #{tpu_custom_call.1} parent=63 // loop_footer
              %s680 = sadd.s32 1, %s676
            $region70: #{tpu_custom_call.1} parent=63 // loop_footer_branch
              %675 = sbr.rel target = $region66
            $region71: #{tpu_custom_call.1} parent=63 // loop_exit
              _
          $region64: #{tpu_custom_call.1} parent=48 // pred_fallthru
            _
          // Predicated region
          $region72: #{tpu_custom_call.1} parent=48 // pred_check
            _
          $region73: #{tpu_custom_call.1} parent=48 // pred_check_branch
            %690 = sbr.rel target = $region75
          $region74: #{tpu_custom_call.1} parent=48 // pred_region
            _
          $region75: #{tpu_custom_call.1} parent=48 // pred_fallthru
            _
        $region49: #{tpu_custom_call.1} parent=44 // pred_fallthru
          _
        // Predicated region
        $region50: #{tpu_custom_call.1} parent=44 // pred_check
          _
        $region51: #{tpu_custom_call.1} parent=44 // pred_check_branch
          %657 = sbr.rel target = $region53
        $region52: #{tpu_custom_call.1} parent=44 // pred_region
          loop: start=0, step=1, limit=1
          $region54: #{tpu_custom_call.1} parent=52 // loop_pre_header
            _
          $region55: #{tpu_custom_call.1} parent=52 // loop_header
            %s660 = sphi 0, %s664
            %p661 = scmp.ge.s32.totalorder %s660, 1
            %s665 = sphi [#allocation4], [#allocation4]
            %s666 = sphi %s8, %s8
          $region56: #{tpu_custom_call.1} parent=52 // loop_header_branch
            %663 = sbr.rel (%p661) target = $region60
          $region57: #{tpu_custom_call.1} parent=52 // loop_body
            %v667 = vld [vmem:[%s665] sm:$0xff]
            %668 = vst [vmem:[%s666] sm:$0xff] %v667
            %v669 = vld [vmem:[%s665 + $0x8] sm:$0xff]
            %670 = vst [vmem:[%s666 + $0x8] sm:$0xff] %v669
            %v671 = vld [vmem:[%s665 + $0x10] sm:$0xff]
            %672 = vst [vmem:[%s666 + $0x10] sm:$0xff] %v671
          $region58: #{tpu_custom_call.1} parent=52 // loop_footer
            %s664 = sadd.s32 1, %s660
          $region59: #{tpu_custom_call.1} parent=52 // loop_footer_branch
            %659 = sbr.rel target = $region55
          $region60: #{tpu_custom_call.1} parent=52 // loop_exit
            _
        $region53: #{tpu_custom_call.1} parent=44 // pred_fallthru
          _
      $region45: #{tpu_custom_call.1} parent=40 // pred_fallthru
        _
      %691 = vnop
    $region41: #{tpu_custom_call.1} parent=1 // pred_fallthru
      _
    // Predicated region
    $region76: #{tpu_custom_call.1} parent=1 // pred_check
      _
    $region77: #{tpu_custom_call.1} parent=1 // pred_check_branch
      %693 = sbr.rel (0) target = $region79
    $region78: #{tpu_custom_call.1} parent=1 // pred_region
      _
    $region79: #{tpu_custom_call.1} parent=1 // pred_fallthru
      _
    %694 = vsyncpa [#allocation3], 1

</llo_original>
